<compile_context>
chip_gen: v5e
topology: v5e:2x2
jax: 0.10.0
libtpu: 0.0.40
codegen_flags: <defaults>
</compile_context>

<pallas_src>
import functools

import jax
import jax.numpy as jnp
from jax.experimental import pallas as pl
from jax.experimental.pallas import tpu as pltpu

C_IN = 768
C_OUT = 256
N_PAD = 128   # lane-dense padded logit width (real logits = first 2 columns)


def _cdiv(a, b):
    return -(-a // b)


def _round_up(x, m):
    return ((x + m - 1) // m) * m


def _default_max_batch_tile():
    """512 on 128-MiB-VMEM chips (v5e/v6e), 256 on 64-MiB chips (v7x)."""
    try:
        vmem = getattr(pltpu.get_tpu_info(), "vmem_capacity_bytes", 0)
        if vmem >= 96 * 1024 * 1024:
            return 512
    except Exception:
        pass
    return 256


def _classifier_kernel(x_ref, wc_ref, bc_ref, g_ref, bt_ref, wl_ref, bl_ref,
                       o_ref, *, k, l_out, eps):
    """Fused Conv1d + LayerNorm + ReLU + Linear on one batch tile.

    x_ref : (TB, L*768)      f32 flattened input window (cast to bf16 here)
    wc_ref: (k*768, 256)     bf16 per-tap conv weight (dense, no zeros)
    bc_ref: (1, l_out*256)   f32 conv bias (tiled per output position)
    g_ref : (1, l_out*256)   f32 LayerNorm gamma (position-major)
    bt_ref: (1, l_out*256)   f32 LayerNorm beta
    wl_ref: (l_out*256, 128) bf16 Linear weight (cols >= 2 are zero)
    bl_ref: (1, 128)         f32 Linear bias   (cols >= 2 are zero)
    o_ref : (TB, 128)        f32 padded logits
    """
    # In-kernel bf16 cast: x is read from HBM exactly once as f32 (no separate
    # wrapper cast pass); the cast is VPU work hidden under the MXU.
    xb = x_ref[...].astype(jnp.bfloat16)
    wc = wc_ref[...]

    # Conv1d as l_out dense MXU contractions (one per output position).  Each
    # tap window is a static, 128-lane-aligned slice of the flattened input
    # (C_IN = 768 = 6*128), so slicing is whole-vreg selection.
    parts = [
        jnp.dot(xb[:, t * C_IN:(t + k) * C_IN], wc,
                preferred_element_type=jnp.float32)
        for t in range(l_out)
    ]
    conv = parts[0] if l_out == 1 else jnp.concatenate(parts, axis=1)
    conv = conv + bc_ref[...]                      # (TB, l_out*256), f32

    # LayerNorm over all l_out*256 values per row: single-pass statistics
    # (sum + sum-of-squares), f32, with a non-negativity guard on the variance.
    inv_n = 1.0 / float(l_out * C_OUT)
    s1 = jnp.sum(conv, axis=1, keepdims=True)
    s2 = jnp.sum(conv * conv, axis=1, keepdims=True)
    mean = s1 * inv_n
    var = jnp.maximum(s2 * inv_n - mean * mean, 0.0)
    inv = jax.lax.rsqrt(var + eps)

    a = jnp.maximum((conv - mean) * inv * g_ref[...] + bt_ref[...], 0.0)

    # Final Linear: bf16 MXU operands, f32 accumulate, lane-dense output
    # (only the first 2 columns are meaningful).
    o_ref[...] = jnp.dot(a.astype(jnp.bfloat16), wl_ref[...],
                         preferred_element_type=jnp.float32) + bl_ref[...]


def prepare_classifier_params(params, *, window_size,
                              compute_dtype=jnp.bfloat16):
    """One-time re-layout of PyTorch-shaped parameters for the fused kernel."""
    k = 2 if window_size == 1 else 2 * window_size - 2
    seq_len = 2 * window_size
    l_out = seq_len - k + 1

    conv_w = jnp.asarray(params["conv_w"], jnp.float32)   # (256, 768, k)
    conv_b = jnp.asarray(params["conv_b"], jnp.float32)   # (256,)
    ln_w = jnp.asarray(params["ln_w"], jnp.float32)       # (256, l_out)
    ln_b = jnp.asarray(params["ln_b"], jnp.float32)       # (256, l_out)
    lin_w = jnp.asarray(params["lin_w"], jnp.float32)     # (2, 256*l_out)
    lin_b = jnp.asarray(params["lin_b"], jnp.float32)     # (2,)

    # Dense per-tap conv weight shared by all output positions:
    #   wc[j*768 + c, o] = conv_w[o, c, j]
    wc = jnp.transpose(conv_w, (2, 1, 0)).reshape(k * C_IN, C_OUT)
    wc = wc.astype(compute_dtype)

    bc = jnp.tile(conv_b, l_out).reshape(1, l_out * C_OUT)      # position-major
    g = ln_w.T.reshape(1, l_out * C_OUT)
    bt = ln_b.T.reshape(1, l_out * C_OUT)

    # PyTorch flattens the (256, l_out) activation c-major: flat[c*l_out + t].
    # Re-group the Linear weight to position-major rows, pad N: 2 -> 128, bf16.
    wl2 = jnp.transpose(lin_w.reshape(2, C_OUT, l_out), (2, 1, 0)).reshape(
        l_out * C_OUT, 2)
    wl = jnp.zeros((l_out * C_OUT, N_PAD), jnp.float32).at[:, :2].set(wl2)
    wl = wl.astype(compute_dtype)
    bl = jnp.zeros((1, N_PAD), jnp.float32).at[:, :2].set(lin_b)  # bias stays f32

    return {"wc": wc, "bc": bc, "g": g, "bt": bt, "wl": wl, "bl": bl}


def classifier_forward(x, prep, *, eps=1e-5, max_batch_tile=None):
    """x: (B, 2*window_size, 768) f32 -> logits (B, 2)."""
    wc, bc, g, bt = prep["wc"], prep["bc"], prep["g"], prep["bt"]
    wl, bl = prep["wl"], prep["bl"]
    batch, seq_len, c_in = x.shape
    flat_in = seq_len * c_in
    k = wc.shape[0] // c_in
    l_out = seq_len - k + 1
    assert bc.shape[1] == l_out * C_OUT

    # Contiguous reshape is free; x stays f32 (cast happens inside the kernel).
    xf = x.reshape(batch, flat_in)

    # Batch tiling: pad only to the sublane granularity (8), force >= 2 grid
    # steps once batch >= 16 (shards the "parallel" axis across v7x's two TCs;
    # no-op on v5e/v6e), and cap the tile per-chip VMEM budget.
    if max_batch_tile is None:
        max_batch_tile = _default_max_batch_tile()
    batch8 = _round_up(batch, 8)
    n_steps = _cdiv(batch8, max_batch_tile)
    if batch8 >= 16:
        n_steps = max(n_steps, 2)
    tb = _round_up(_cdiv(batch8, n_steps), 8)
    batch_p = tb * n_steps
    if batch_p != batch:
        xf = jnp.pad(xf, ((0, batch_p - batch), (0, 0)))

    def _nbytes(a):
        return a.size * a.dtype.itemsize

    cost = pl.CostEstimate(
        flops=batch_p * (2 * l_out * k * c_in * C_OUT
                         + 2 * l_out * C_OUT * N_PAD),
        transcendentals=batch_p,
        bytes_accessed=(_nbytes(xf) + _nbytes(wc) + _nbytes(bc) + _nbytes(g)
                        + _nbytes(bt) + _nbytes(wl) + _nbytes(bl)
                        + batch_p * N_PAD * 4),
    )

    out = pl.pallas_call(
        functools.partial(_classifier_kernel, k=k, l_out=l_out, eps=eps),
        out_shape=jax.ShapeDtypeStruct((batch_p, N_PAD), jnp.float32),
        grid=(n_steps,),
        in_specs=[
            pl.BlockSpec((tb, flat_in), lambda i: (i, 0)),   # streamed x tiles
            pl.BlockSpec(wc.shape, lambda i: (0, 0)),        # resident weights
            pl.BlockSpec(bc.shape, lambda i: (0, 0)),
            pl.BlockSpec(g.shape, lambda i: (0, 0)),
            pl.BlockSpec(bt.shape, lambda i: (0, 0)),
            pl.BlockSpec(wl.shape, lambda i: (0, 0)),
            pl.BlockSpec(bl.shape, lambda i: (0, 0)),
        ],
        out_specs=pl.BlockSpec((tb, N_PAD), lambda i: (i, 0)),
        compiler_params=pltpu.CompilerParams(
            dimension_semantics=("parallel",),
            vmem_limit_bytes=(40 if tb > 256 else 28) * 1024 * 1024,
        ),
        cost_estimate=cost,
    )(xf, wc, bc, g, bt, wl, bl)

    return out[:batch, :2]


def classifier_ref(x, params):
    """Pure-JAX f32 reference matching the PyTorch module exactly."""
    conv_w, conv_b = params["conv_w"], params["conv_b"]
    ln_w, ln_b = params["ln_w"], params["ln_b"]
    lin_w, lin_b = params["lin_w"], params["lin_b"]
    k = conv_w.shape[2]
    batch, seq_len, _ = x.shape
    l_out = seq_len - k + 1

    xt = jnp.transpose(x, (0, 2, 1))                             # (B, 768, L)
    conv = jnp.stack(
        [jnp.einsum("ocj,bcj->bo", conv_w, xt[:, :, t:t + k])
         for t in range(l_out)],
        axis=2,
    ) + conv_b[None, :, None]                                    # (B, 256, l_out)
    mean = conv.mean(axis=(1, 2), keepdims=True)
    var = jnp.square(conv - mean).mean(axis=(1, 2), keepdims=True)
    normed = (conv - mean) / jnp.sqrt(var + 1e-5) * ln_w[None] + ln_b[None]
    act = jnp.maximum(normed, 0.0)
    flat = act.reshape(batch, -1)
    return flat @ lin_w.T + lin_b


def _make_params(key, window_size):
    k = 2 if window_size == 1 else 2 * window_size - 2
    l_out = 1 if window_size == 1 else 3
    flat_size = 256 * l_out
    k_cw, k_cb, k_gw, k_gb, k_lw, k_lb = jax.random.split(key, 6)
    return {
        "conv_w": 0.02 * jax.random.normal(k_cw, (256, C_IN, k), jnp.float32),
        "conv_b": 0.02 * jax.random.normal(k_cb, (256,), jnp.float32),
        "ln_w": 1.0 + 0.1 * jax.random.normal(k_gw, (256, l_out), jnp.float32),
        "ln_b": 0.1 * jax.random.normal(k_gb, (256, l_out), jnp.float32),
        "lin_w": 0.05 * jax.random.normal(k_lw, (2, flat_size), jnp.float32),
        "lin_b": 0.05 * jax.random.normal(k_lb, (2,), jnp.float32),
    }


if __name__ == "__main__":
    key = jax.random.PRNGKey(0)
    fwd = jax.jit(classifier_forward)

    # Case 1: window_size=2 -> conv kernel 2, LayerNorm over (256, 3).
    k_p1, k_x1, k_p2, k_x2 = jax.random.split(key, 4)
    batch1, ws1 = 2, 2
    params1 = _make_params(k_p1, ws1)
    x1 = jax.random.normal(k_x1, (batch1, 2 * ws1, C_IN), jnp.float32)
    prep1 = prepare_classifier_params(params1, window_size=ws1)
    out1 = jax.block_until_ready(fwd(x1, prep1))
    ref1 = classifier_ref(x1, params1)
    assert out1.shape == (batch1, 2), out1.shape
    assert jnp.allclose(out1, ref1, rtol=2e-2, atol=2e-2), (out1, ref1)

    # Case 2: window_size=1 -> conv kernel 2, LayerNorm over (256, 1).
    batch2, ws2 = 3, 1
    params2 = _make_params(k_p2, ws2)
    x2 = jax.random.normal(k_x2, (batch2, 2 * ws2, C_IN), jnp.float32)
    prep2 = prepare_classifier_params(params2, window_size=ws2)
    out2 = jax.block_until_ready(fwd(x2, prep2))
    ref2 = classifier_ref(x2, params2)
    assert out2.shape == (batch2, 2), out2.shape
    assert jnp.allclose(out2, ref2, rtol=2e-2, atol=2e-2), (out2, ref2)

    print("KERNEL_OK")
</pallas_src>

<mosaic_0001>
module attributes {stable_mosaic.version = 11 : i64} {
  func.func @_classifier_kernel(%arg0: i32, %arg1: memref<8x3072xf32, #tpu.memory_space<vmem>>, %arg2: memref<1536x256xbf16, #tpu.memory_space<vmem>>, %arg3: memref<1x768xf32, #tpu.memory_space<vmem>>, %arg4: memref<1x768xf32, #tpu.memory_space<vmem>>, %arg5: memref<1x768xf32, #tpu.memory_space<vmem>>, %arg6: memref<768x128xbf16, #tpu.memory_space<vmem>>, %arg7: memref<1x128xf32, #tpu.memory_space<vmem>>, %arg8: memref<8x128xf32, #tpu.memory_space<vmem>>) attributes {dimension_semantics = [#tpu.dimension_semantics<parallel>], iteration_bounds = array<i64: 1>, scalar_prefetch = 0 : i64, scratch_operands = 0 : i64, tpu.core_type = #tpu.core_type<tc>, window_params = [{transform_indices = @transform_0, window_bounds = array<i64: 8, 3072>}, {pipeline_mode = #tpu.pipeline_mode<synchronous>, transform_indices = @transform_1, window_bounds = array<i64: 1536, 256>}, {pipeline_mode = #tpu.pipeline_mode<synchronous>, transform_indices = @transform_2, window_bounds = array<i64: 1, 768>}, {pipeline_mode = #tpu.pipeline_mode<synchronous>, transform_indices = @transform_3, window_bounds = array<i64: 1, 768>}, {pipeline_mode = #tpu.pipeline_mode<synchronous>, transform_indices = @transform_4, window_bounds = array<i64: 1, 768>}, {pipeline_mode = #tpu.pipeline_mode<synchronous>, transform_indices = @transform_5, window_bounds = array<i64: 768, 128>}, {pipeline_mode = #tpu.pipeline_mode<synchronous>, transform_indices = @transform_6, window_bounds = array<i64: 1, 128>}, {transform_indices = @transform_7, window_bounds = array<i64: 8, 128>}]} {
    %c0 = arith.constant 0 : index
    %c0_0 = arith.constant 0 : index
    %0 = vector.load %arg1[%c0, %c0_0] : memref<8x3072xf32, #tpu.memory_space<vmem>>, vector<8x3072xf32>
    %1 = arith.truncf %0 : vector<8x3072xf32> to vector<8x3072xbf16>
    %c0_1 = arith.constant 0 : index
    %c0_2 = arith.constant 0 : index
    %2 = vector.load %arg2[%c0_1, %c0_2] : memref<1536x256xbf16, #tpu.memory_space<vmem>>, vector<1536x256xbf16>
    %3 = vector.extract_strided_slice %1 {offsets = [0, 0], sizes = [8, 1536], strides = [1, 1]} : vector<8x3072xbf16> to vector<8x1536xbf16>
    %cst = arith.constant dense<0.000000e+00> : vector<8x256xf32>
    %4 = tpu.matmul %3, %2, %cst {dimension_numbers = #tpu.dot_dimension_numbers<[1], [0], [0], [1], [0, 0, 1, 1], [], []>} : vector<8x1536xbf16>, vector<1536x256xbf16>, vector<8x256xf32> -> vector<8x256xf32>
    %5 = vector.extract_strided_slice %1 {offsets = [0, 768], sizes = [8, 1536], strides = [1, 1]} : vector<8x3072xbf16> to vector<8x1536xbf16>
    %cst_3 = arith.constant dense<0.000000e+00> : vector<8x256xf32>
    %6 = tpu.matmul %5, %2, %cst_3 {dimension_numbers = #tpu.dot_dimension_numbers<[1], [0], [0], [1], [0, 0, 1, 1], [], []>} : vector<8x1536xbf16>, vector<1536x256xbf16>, vector<8x256xf32> -> vector<8x256xf32>
    %7 = vector.extract_strided_slice %1 {offsets = [0, 1536], sizes = [8, 1536], strides = [1, 1]} : vector<8x3072xbf16> to vector<8x1536xbf16>
    %cst_4 = arith.constant dense<0.000000e+00> : vector<8x256xf32>
    %8 = tpu.matmul %7, %2, %cst_4 {dimension_numbers = #tpu.dot_dimension_numbers<[1], [0], [0], [1], [0, 0, 1, 1], [], []>} : vector<8x1536xbf16>, vector<1536x256xbf16>, vector<8x256xf32> -> vector<8x256xf32>
    %9 = tpu.concatenate %4, %6, %8 in 1 : vector<8x256xf32>, vector<8x256xf32>, vector<8x256xf32> -> vector<8x768xf32>
    %c0_5 = arith.constant 0 : index
    %c0_6 = arith.constant 0 : index
    %10 = vector.load %arg3[%c0_5, %c0_6] : memref<1x768xf32, #tpu.memory_space<vmem>>, vector<1x768xf32>
    %11 = vector.broadcast %10 : vector<1x768xf32> to vector<8x768xf32>
    %12 = arith.addf %9, %11 : vector<8x768xf32>
    %cst_7 = arith.constant dense<0.000000e+00> : vector<8xf32>
    %13 = vector.multi_reduction <add>, %12, %cst_7 [1] : vector<8x768xf32> to vector<8xf32>
    %14 = vector.shape_cast %13 : vector<8xf32> to vector<8x1xf32>
    %15 = arith.mulf %12, %12 : vector<8x768xf32>
    %cst_8 = arith.constant dense<0.000000e+00> : vector<8xf32>
    %16 = vector.multi_reduction <add>, %15, %cst_8 [1] : vector<8x768xf32> to vector<8xf32>
    %17 = vector.shape_cast %16 : vector<8xf32> to vector<8x1xf32>
    %cst_9 = arith.constant 0.00130208337 : f32
    %18 = vector.broadcast %cst_9 : f32 to vector<8x1xf32>
    %19 = arith.mulf %14, %18 : vector<8x1xf32>
    %cst_10 = arith.constant 0.00130208337 : f32
    %20 = vector.broadcast %cst_10 : f32 to vector<8x1xf32>
    %21 = arith.mulf %17, %20 : vector<8x1xf32>
    %22 = arith.mulf %19, %19 : vector<8x1xf32>
    %23 = arith.subf %21, %22 : vector<8x1xf32>
    %cst_11 = arith.constant 0.000000e+00 : f32
    %24 = vector.broadcast %cst_11 : f32 to vector<8x1xf32>
    %25 = arith.maximumf %23, %24 : vector<8x1xf32>
    %cst_12 = arith.constant 9.99999974E-6 : f32
    %26 = vector.broadcast %cst_12 : f32 to vector<8x1xf32>
    %27 = arith.addf %25, %26 : vector<8x1xf32>
    %28 = math.rsqrt %27 : vector<8x1xf32>
    %29 = vector.broadcast %19 : vector<8x1xf32> to vector<8x768xf32>
    %30 = arith.subf %12, %29 : vector<8x768xf32>
    %31 = vector.broadcast %28 : vector<8x1xf32> to vector<8x768xf32>
    %32 = arith.mulf %30, %31 : vector<8x768xf32>
    %c0_13 = arith.constant 0 : index
    %c0_14 = arith.constant 0 : index
    %33 = vector.load %arg4[%c0_13, %c0_14] : memref<1x768xf32, #tpu.memory_space<vmem>>, vector<1x768xf32>
    %34 = vector.broadcast %33 : vector<1x768xf32> to vector<8x768xf32>
    %35 = arith.mulf %32, %34 : vector<8x768xf32>
    %c0_15 = arith.constant 0 : index
    %c0_16 = arith.constant 0 : index
    %36 = vector.load %arg5[%c0_15, %c0_16] : memref<1x768xf32, #tpu.memory_space<vmem>>, vector<1x768xf32>
    %37 = vector.broadcast %36 : vector<1x768xf32> to vector<8x768xf32>
    %38 = arith.addf %35, %37 : vector<8x768xf32>
    %cst_17 = arith.constant 0.000000e+00 : f32
    %39 = vector.broadcast %cst_17 : f32 to vector<8x768xf32>
    %40 = arith.maximumf %38, %39 : vector<8x768xf32>
    %41 = arith.truncf %40 : vector<8x768xf32> to vector<8x768xbf16>
    %c0_18 = arith.constant 0 : index
    %c0_19 = arith.constant 0 : index
    %42 = vector.load %arg6[%c0_18, %c0_19] : memref<768x128xbf16, #tpu.memory_space<vmem>>, vector<768x128xbf16>
    %cst_20 = arith.constant dense<0.000000e+00> : vector<8x128xf32>
    %43 = tpu.matmul %41, %42, %cst_20 {dimension_numbers = #tpu.dot_dimension_numbers<[1], [0], [0], [1], [0, 0, 1, 1], [], []>} : vector<8x768xbf16>, vector<768x128xbf16>, vector<8x128xf32> -> vector<8x128xf32>
    %c0_21 = arith.constant 0 : index
    %c0_22 = arith.constant 0 : index
    %44 = vector.load %arg7[%c0_21, %c0_22] : memref<1x128xf32, #tpu.memory_space<vmem>>, vector<1x128xf32>
    %45 = vector.broadcast %44 : vector<1x128xf32> to vector<8x128xf32>
    %46 = arith.addf %43, %45 : vector<8x128xf32>
    %c0_23 = arith.constant 0 : index
    %c0_24 = arith.constant 0 : index
    %47 = vector.load %arg8[%c0_23, %c0_24] : memref<8x128xf32, #tpu.memory_space<vmem>>, vector<8x128xf32>
    tpu.vector_store %arg8[%c0_23, %c0_24], %46 {strides = array<i32>} : memref<8x128xf32, #tpu.memory_space<vmem>>, vector<8x128xf32>,
    return
  }
  func.func @transform_0(%arg0: i32) -> (i32, i32) {
    %c0_i32 = arith.constant 0 : i32
    %c0_i32_0 = arith.constant 0 : i32
    return %arg0, %c0_i32 : i32, i32
  }
  func.func @transform_1(%arg0: i32) -> (i32, i32) {
    %c0_i32 = arith.constant 0 : i32
    %c0_i32_0 = arith.constant 0 : i32
    %c0_i32_1 = arith.constant 0 : i32
    return %c0_i32, %c0_i32_0 : i32, i32
  }
  func.func @transform_2(%arg0: i32) -> (i32, i32) {
    %c0_i32 = arith.constant 0 : i32
    %c0_i32_0 = arith.constant 0 : i32
    %c0_i32_1 = arith.constant 0 : i32
    return %c0_i32, %c0_i32_0 : i32, i32
  }
  func.func @transform_3(%arg0: i32) -> (i32, i32) {
    %c0_i32 = arith.constant 0 : i32
    %c0_i32_0 = arith.constant 0 : i32
    %c0_i32_1 = arith.constant 0 : i32
    return %c0_i32, %c0_i32_0 : i32, i32
  }
  func.func @transform_4(%arg0: i32) -> (i32, i32) {
    %c0_i32 = arith.constant 0 : i32
    %c0_i32_0 = arith.constant 0 : i32
    %c0_i32_1 = arith.constant 0 : i32
    return %c0_i32, %c0_i32_0 : i32, i32
  }
  func.func @transform_5(%arg0: i32) -> (i32, i32) {
    %c0_i32 = arith.constant 0 : i32
    %c0_i32_0 = arith.constant 0 : i32
    %c0_i32_1 = arith.constant 0 : i32
    return %c0_i32, %c0_i32_0 : i32, i32
  }
  func.func @transform_6(%arg0: i32) -> (i32, i32) {
    %c0_i32 = arith.constant 0 : i32
    %c0_i32_0 = arith.constant 0 : i32
    %c0_i32_1 = arith.constant 0 : i32
    return %c0_i32, %c0_i32_0 : i32, i32
  }
  func.func @transform_7(%arg0: i32) -> (i32, i32) {
    %c0_i32 = arith.constant 0 : i32
    %c0_i32_0 = arith.constant 0 : i32
    return %arg0, %c0_i32 : i32, i32
  }
}

</mosaic_0001>

<llo_original>
// kernel: classifier_forward.1
$region0: #{classifier_forward.1}
  #allocation0 [shape = 'u32[]', space=smem, size = 0x4, offset = 0x4, fixed_abs, tag = 'smem constant byte address 0x4 - core index']
  #allocation1 [shape = 'u32[72,128]{1,0:T(1,128)}', space=vmem, size = 0x9000, scoped, tag = 'internal scratch']
  %s0 = inlined_call_operand.vmem [shape: f32[8,3072], index: 0, kind: input, shape index: {}]
  %s1 = inlined_call_operand.hbm [shape: bf16[1536,256], index: 1, kind: input, shape index: {}]
  %s2 = inlined_call_operand.vmem [shape: f32[1,768], index: 2, kind: input, shape index: {}]
  %s3 = inlined_call_operand.vmem [shape: f32[1,768], index: 3, kind: input, shape index: {}]
  %s4 = inlined_call_operand.vmem [shape: f32[1,768], index: 4, kind: input, shape index: {}]
  %s5 = inlined_call_operand.hbm [shape: bf16[768,128], index: 5, kind: input, shape index: {}]
  %s6 = inlined_call_operand.vmem [shape: f32[1,128], index: 6, kind: input, shape index: {}]
  %s7 = inlined_call_operand.vmem [shape: f32[8,128], index: 7, kind: output, shape index: {}]
  %s8 = sld [smem:[#allocation0]]
  $region46: #{classifier_forward.1} parent=0
    _
  %s10 = ssub.s32 1, %s8
  %s11 = scalar_select 0, %s10, %s8
  $region1: #{classifier_forward.1} parent=0
    #allocation2 [shape = 'u8[786432]{0}', space=vmem, size = 0xc0000, scoped, tag = 'input window, operand 1, single buffered']
    #allocation3 [shape = 's32[1]{0}', space=sflag, size = 0x4, scoped, tag = 'scoped memory for classifier_forward.1']
    #allocation4 [shape = 'u8[196608]{0}', space=vmem, size = 0x30000, scoped, tag = 'input window, operand 5, single buffered']
    #allocation5 [shape = 's32[1]{0}', space=sflag, size = 0x4, scoped, tag = 'scoped memory for classifier_forward.1']
    %12 = vsyncpa [#allocation3], 0
    %13 = vsyncpa [#allocation5], 0
    // Predicated region
    $region2: #{classifier_forward.1} parent=1 // pred_check
      _
    $region3: #{classifier_forward.1} parent=1 // pred_check_branch
      %15 = sbr.rel (0) target = $region5
    $region4: #{classifier_forward.1} parent=1 // pred_region
      _
    $region5: #{classifier_forward.1} parent=1 // pred_fallthru
      _
    // Predicated region
    $region6: #{classifier_forward.1} parent=1 // pred_check
      _
    $region7: #{classifier_forward.1} parent=1 // pred_check_branch
      %17 = sbr.rel (0) target = $region9
    $region8: #{classifier_forward.1} parent=1 // pred_region
      %19 = vsyncadd [#allocation3], 0
      %s20 = sshll.u32 %s1, 4
      %s21 = int_to_ptr.hbm [resolvable:$true] %s20
      %s22 = sshll.u32 [#allocation2], 4
      %s23 = int_to_ptr.vmem [resolvable:$true] %s22
      %28 = dma.hbm_to_vmem [thread:$0]  %s21, 24576, %s23, [#allocation3], 128, 128, 8
    $region9: #{classifier_forward.1} parent=1 // pred_fallthru
      _
    // Predicated region
    $region10: #{classifier_forward.1} parent=1 // pred_check
      _
    $region11: #{classifier_forward.1} parent=1 // pred_check_branch
      %30 = sbr.rel (0) target = $region13
    $region12: #{classifier_forward.1} parent=1 // pred_region
      _
    $region13: #{classifier_forward.1} parent=1 // pred_fallthru
      _
    // Predicated region
    $region14: #{classifier_forward.1} parent=1 // pred_check
      _
    $region15: #{classifier_forward.1} parent=1 // pred_check_branch
      %32 = sbr.rel (0) target = $region17
    $region16: #{classifier_forward.1} parent=1 // pred_region
      _
    $region17: #{classifier_forward.1} parent=1 // pred_fallthru
      _
    // Predicated region
    $region18: #{classifier_forward.1} parent=1 // pred_check
      _
    $region19: #{classifier_forward.1} parent=1 // pred_check_branch
      %34 = sbr.rel (0) target = $region21
    $region20: #{classifier_forward.1} parent=1 // pred_region
      _
    $region21: #{classifier_forward.1} parent=1 // pred_fallthru
      _
    // Predicated region
    $region22: #{classifier_forward.1} parent=1 // pred_check
      _
    $region23: #{classifier_forward.1} parent=1 // pred_check_branch
      %36 = sbr.rel (0) target = $region25
    $region24: #{classifier_forward.1} parent=1 // pred_region
      %38 = vsyncadd [#allocation5], 0
      %s39 = sshll.u32 %s5, 4
      %s40 = int_to_ptr.hbm [resolvable:$true] %s39
      %s41 = sshll.u32 [#allocation4], 4
      %s42 = int_to_ptr.vmem [resolvable:$true] %s41
      %47 = dma.hbm_to_vmem [thread:$0]  %s40, 6144, %s42, [#allocation5], 64, 64, 4
    $region25: #{classifier_forward.1} parent=1 // pred_fallthru
      _
    // Predicated region
    $region26: #{classifier_forward.1} parent=1 // pred_check
      _
    $region27: #{classifier_forward.1} parent=1 // pred_check_branch
      %49 = sbr.rel (0) target = $region29
    $region28: #{classifier_forward.1} parent=1 // pred_region
      _
    $region29: #{classifier_forward.1} parent=1 // pred_fallthru
      _
    // Predicated region
    $region30: #{classifier_forward.1} parent=1 // pred_check
      _
    $region31: #{classifier_forward.1} parent=1 // pred_check_branch
      %51 = sbr.rel (0) target = $region33
    $region32: #{classifier_forward.1} parent=1 // pred_region
      %53 = dma.done [#allocation3], 24576
    $region33: #{classifier_forward.1} parent=1 // pred_fallthru
      _
    // Predicated region
    $region34: #{classifier_forward.1} parent=1 // pred_check
      _
    $region35: #{classifier_forward.1} parent=1 // pred_check_branch
      %55 = sbr.rel (0) target = $region37
    $region36: #{classifier_forward.1} parent=1 // pred_region
      %57 = dma.done [#allocation5], 6144
    $region37: #{classifier_forward.1} parent=1 // pred_fallthru
      _
    %v58 = vld [vmem:[%s0] sm:$0xff]
    %v59 = vld [vmem:[%s0 + $0x8] sm:$0xff]
    %v60 = vld [vmem:[%s0 + $0x10] sm:$0xff]
    %v61 = vld [vmem:[%s0 + $0x18] sm:$0xff]
    %v62 = vld [vmem:[%s0 + $0x20] sm:$0xff]
    %v63 = vld [vmem:[%s0 + $0x28] sm:$0xff]
    %v64 = vld [vmem:[%s0 + $0x30] sm:$0xff]
    %v65 = vld [vmem:[%s0 + $0x38] sm:$0xff]
    %v66 = vld [vmem:[%s0 + $0x40] sm:$0xff]
    %v67 = vld [vmem:[%s0 + $0x48] sm:$0xff]
    %v68 = vld [vmem:[%s0 + $0x50] sm:$0xff]
    %v69 = vld [vmem:[%s0 + $0x58] sm:$0xff]
    %v70 = vld [vmem:[%s0 + $0x60] sm:$0xff]
    %v71 = vld [vmem:[%s0 + $0x68] sm:$0xff]
    %v72 = vld [vmem:[%s0 + $0x70] sm:$0xff]
    %v73 = vld [vmem:[%s0 + $0x78] sm:$0xff]
    %v74 = vld [vmem:[%s0 + $0x80] sm:$0xff]
    %v75 = vld [vmem:[%s0 + $0x88] sm:$0xff]
    %v76 = vld [vmem:[%s0 + $0x90] sm:$0xff]
    %v77 = vld [vmem:[%s0 + $0x98] sm:$0xff]
    %v78 = vld [vmem:[%s0 + $0xa0] sm:$0xff]
    %v79 = vld [vmem:[%s0 + $0xa8] sm:$0xff]
    %v80 = vld [vmem:[%s0 + $0xb0] sm:$0xff]
    %v81 = vld [vmem:[%s0 + $0xb8] sm:$0xff]
    %v82 = vpack.c.bf16 %v59, %v58
    %v83 = vpack.c.bf16 %v61, %v60
    %v84 = vpack.c.bf16 %v63, %v62
    %v85 = vpack.c.bf16 %v65, %v64
    %v86 = vpack.c.bf16 %v67, %v66
    %v87 = vpack.c.bf16 %v69, %v68
    %v88 = vpack.c.bf16 %v71, %v70
    %v89 = vpack.c.bf16 %v73, %v72
    %v90 = vpack.c.bf16 %v75, %v74
    %v91 = vpack.c.bf16 %v77, %v76
    %v92 = vpack.c.bf16 %v79, %v78
    %v93 = vpack.c.bf16 %v81, %v80
    %v94 = vld [vmem:[#allocation2] sm:$0xff]
    %v95 = vld [vmem:[#allocation2 + $0x8] sm:$0xff]
    %v96 = vld [vmem:[#allocation2 + $0x10] sm:$0xff]
    %v97 = vld [vmem:[#allocation2 + $0x18] sm:$0xff]
    %v98 = vld [vmem:[#allocation2 + $0x20] sm:$0xff]
    %v99 = vld [vmem:[#allocation2 + $0x28] sm:$0xff]
    %v100 = vld [vmem:[#allocation2 + $0x30] sm:$0xff]
    %v101 = vld [vmem:[#allocation2 + $0x38] sm:$0xff]
    %v102 = vld [vmem:[#allocation2 + $0x40] sm:$0xff]
    %v103 = vld [vmem:[#allocation2 + $0x48] sm:$0xff]
    %v104 = vld [vmem:[#allocation2 + $0x50] sm:$0xff]
    %v105 = vld [vmem:[#allocation2 + $0x58] sm:$0xff]
    %v106 = vld [vmem:[#allocation2 + $0x60] sm:$0xff]
    %v107 = vld [vmem:[#allocation2 + $0x68] sm:$0xff]
    %v108 = vld [vmem:[#allocation2 + $0x70] sm:$0xff]
    %v109 = vld [vmem:[#allocation2 + $0x78] sm:$0xff]
    %v110 = vld [vmem:[#allocation2 + $0x80] sm:$0xff]
    %v111 = vld [vmem:[#allocation2 + $0x88] sm:$0xff]
    %v112 = vld [vmem:[#allocation2 + $0x90] sm:$0xff]
    %v113 = vld [vmem:[#allocation2 + $0x98] sm:$0xff]
    %v114 = vld [vmem:[#allocation2 + $0xa0] sm:$0xff]
    %v115 = vld [vmem:[#allocation2 + $0xa8] sm:$0xff]
    %v116 = vld [vmem:[#allocation2 + $0xb0] sm:$0xff]
    %v117 = vld [vmem:[#allocation2 + $0xb8] sm:$0xff]
    %v118 = vld [vmem:[#allocation2 + $0xc0] sm:$0xff]
    %v119 = vld [vmem:[#allocation2 + $0xc8] sm:$0xff]
    %v120 = vld [vmem:[#allocation2 + $0xd0] sm:$0xff]
    %v121 = vld [vmem:[#allocation2 + $0xd8] sm:$0xff]
    %v122 = vld [vmem:[#allocation2 + $0xe0] sm:$0xff]
    %v123 = vld [vmem:[#allocation2 + $0xe8] sm:$0xff]
    %v124 = vld [vmem:[#allocation2 + $0xf0] sm:$0xff]
    %v125 = vld [vmem:[#allocation2 + $0xf8] sm:$0xff]
    %v126 = vld [vmem:[#allocation2 + $0x100] sm:$0xff]
    %v127 = vld [vmem:[#allocation2 + $0x108] sm:$0xff]
    %v128 = vld [vmem:[#allocation2 + $0x110] sm:$0xff]
    %v129 = vld [vmem:[#allocation2 + $0x118] sm:$0xff]
    %v130 = vld [vmem:[#allocation2 + $0x120] sm:$0xff]
    %v131 = vld [vmem:[#allocation2 + $0x128] sm:$0xff]
    %v132 = vld [vmem:[#allocation2 + $0x130] sm:$0xff]
    %v133 = vld [vmem:[#allocation2 + $0x138] sm:$0xff]
    %v134 = vld [vmem:[#allocation2 + $0x140] sm:$0xff]
    %v135 = vld [vmem:[#allocation2 + $0x148] sm:$0xff]
    %v136 = vld [vmem:[#allocation2 + $0x150] sm:$0xff]
    %v137 = vld [vmem:[#allocation2 + $0x158] sm:$0xff]
    %v138 = vld [vmem:[#allocation2 + $0x160] sm:$0xff]
    %v139 = vld [vmem:[#allocation2 + $0x168] sm:$0xff]
    %v140 = vld [vmem:[#allocation2 + $0x170] sm:$0xff]
    %v141 = vld [vmem:[#allocation2 + $0x178] sm:$0xff]
    %v142 = vld [vmem:[#allocation2 + $0x180] sm:$0xff]
    %v143 = vld [vmem:[#allocation2 + $0x188] sm:$0xff]
    %v144 = vld [vmem:[#allocation2 + $0x190] sm:$0xff]
    %v145 = vld [vmem:[#allocation2 + $0x198] sm:$0xff]
    %v146 = vld [vmem:[#allocation2 + $0x1a0] sm:$0xff]
    %v147 = vld [vmem:[#allocation2 + $0x1a8] sm:$0xff]
    %v148 = vld [vmem:[#allocation2 + $0x1b0] sm:$0xff]
    %v149 = vld [vmem:[#allocation2 + $0x1b8] sm:$0xff]
    %v150 = vld [vmem:[#allocation2 + $0x1c0] sm:$0xff]
    %v151 = vld [vmem:[#allocation2 + $0x1c8] sm:$0xff]
    %v152 = vld [vmem:[#allocation2 + $0x1d0] sm:$0xff]
    %v153 = vld [vmem:[#allocation2 + $0x1d8] sm:$0xff]
    %v154 = vld [vmem:[#allocation2 + $0x1e0] sm:$0xff]
    %v155 = vld [vmem:[#allocation2 + $0x1e8] sm:$0xff]
    %v156 = vld [vmem:[#allocation2 + $0x1f0] sm:$0xff]
    %v157 = vld [vmem:[#allocation2 + $0x1f8] sm:$0xff]
    %v158 = vld [vmem:[#allocation2 + $0x200] sm:$0xff]
    %v159 = vld [vmem:[#allocation2 + $0x208] sm:$0xff]
    %v160 = vld [vmem:[#allocation2 + $0x210] sm:$0xff]
    %v161 = vld [vmem:[#allocation2 + $0x218] sm:$0xff]
    %v162 = vld [vmem:[#allocation2 + $0x220] sm:$0xff]
    %v163 = vld [vmem:[#allocation2 + $0x228] sm:$0xff]
    %v164 = vld [vmem:[#allocation2 + $0x230] sm:$0xff]
    %v165 = vld [vmem:[#allocation2 + $0x238] sm:$0xff]
    %v166 = vld [vmem:[#allocation2 + $0x240] sm:$0xff]
    %v167 = vld [vmem:[#allocation2 + $0x248] sm:$0xff]
    %v168 = vld [vmem:[#allocation2 + $0x250] sm:$0xff]
    %v169 = vld [vmem:[#allocation2 + $0x258] sm:$0xff]
    %v170 = vld [vmem:[#allocation2 + $0x260] sm:$0xff]
    %v171 = vld [vmem:[#allocation2 + $0x268] sm:$0xff]
    %v172 = vld [vmem:[#allocation2 + $0x270] sm:$0xff]
    %v173 = vld [vmem:[#allocation2 + $0x278] sm:$0xff]
    %v174 = vld [vmem:[#allocation2 + $0x280] sm:$0xff]
    %v175 = vld [vmem:[#allocation2 + $0x288] sm:$0xff]
    %v176 = vld [vmem:[#allocation2 + $0x290] sm:$0xff]
    %v177 = vld [vmem:[#allocation2 + $0x298] sm:$0xff]
    %v178 = vld [vmem:[#allocation2 + $0x2a0] sm:$0xff]
    %v179 = vld [vmem:[#allocation2 + $0x2a8] sm:$0xff]
    %v180 = vld [vmem:[#allocation2 + $0x2b0] sm:$0xff]
    %v181 = vld [vmem:[#allocation2 + $0x2b8] sm:$0xff]
    %v182 = vld [vmem:[#allocation2 + $0x2c0] sm:$0xff]
    %v183 = vld [vmem:[#allocation2 + $0x2c8] sm:$0xff]
    %v184 = vld [vmem:[#allocation2 + $0x2d0] sm:$0xff]
    %v185 = vld [vmem:[#allocation2 + $0x2d8] sm:$0xff]
    %v186 = vld [vmem:[#allocation2 + $0x2e0] sm:$0xff]
    %v187 = vld [vmem:[#allocation2 + $0x2e8] sm:$0xff]
    %v188 = vld [vmem:[#allocation2 + $0x2f0] sm:$0xff]
    %v189 = vld [vmem:[#allocation2 + $0x2f8] sm:$0xff]
    %v190 = vld [vmem:[#allocation2 + $0x300] sm:$0xff]
    %v191 = vld [vmem:[#allocation2 + $0x308] sm:$0xff]
    %v192 = vld [vmem:[#allocation2 + $0x310] sm:$0xff]
    %v193 = vld [vmem:[#allocation2 + $0x318] sm:$0xff]
    %v194 = vld [vmem:[#allocation2 + $0x320] sm:$0xff]
    %v195 = vld [vmem:[#allocation2 + $0x328] sm:$0xff]
    %v196 = vld [vmem:[#allocation2 + $0x330] sm:$0xff]
    %v197 = vld [vmem:[#allocation2 + $0x338] sm:$0xff]
    %v198 = vld [vmem:[#allocation2 + $0x340] sm:$0xff]
    %v199 = vld [vmem:[#allocation2 + $0x348] sm:$0xff]
    %v200 = vld [vmem:[#allocation2 + $0x350] sm:$0xff]
    %v201 = vld [vmem:[#allocation2 + $0x358] sm:$0xff]
    %v202 = vld [vmem:[#allocation2 + $0x360] sm:$0xff]
    %v203 = vld [vmem:[#allocation2 + $0x368] sm:$0xff]
    %v204 = vld [vmem:[#allocation2 + $0x370] sm:$0xff]
    %v205 = vld [vmem:[#allocation2 + $0x378] sm:$0xff]
    %v206 = vld [vmem:[#allocation2 + $0x380] sm:$0xff]
    %v207 = vld [vmem:[#allocation2 + $0x388] sm:$0xff]
    %v208 = vld [vmem:[#allocation2 + $0x390] sm:$0xff]
    %v209 = vld [vmem:[#allocation2 + $0x398] sm:$0xff]
    %v210 = vld [vmem:[#allocation2 + $0x3a0] sm:$0xff]
    %v211 = vld [vmem:[#allocation2 + $0x3a8] sm:$0xff]
    %v212 = vld [vmem:[#allocation2 + $0x3b0] sm:$0xff]
    %v213 = vld [vmem:[#allocation2 + $0x3b8] sm:$0xff]
    %v214 = vld [vmem:[#allocation2 + $0x3c0] sm:$0xff]
    %v215 = vld [vmem:[#allocation2 + $0x3c8] sm:$0xff]
    %v216 = vld [vmem:[#allocation2 + $0x3d0] sm:$0xff]
    %v217 = vld [vmem:[#allocation2 + $0x3d8] sm:$0xff]
    %v218 = vld [vmem:[#allocation2 + $0x3e0] sm:$0xff]
    %v219 = vld [vmem:[#allocation2 + $0x3e8] sm:$0xff]
    %v220 = vld [vmem:[#allocation2 + $0x3f0] sm:$0xff]
    %v221 = vld [vmem:[#allocation2 + $0x3f8] sm:$0xff]
    %v222 = vld [vmem:[#allocation2 + $0x400] sm:$0xff]
    %v223 = vld [vmem:[#allocation2 + $0x408] sm:$0xff]
    %v224 = vld [vmem:[#allocation2 + $0x410] sm:$0xff]
    %v225 = vld [vmem:[#allocation2 + $0x418] sm:$0xff]
    %v226 = vld [vmem:[#allocation2 + $0x420] sm:$0xff]
    %v227 = vld [vmem:[#allocation2 + $0x428] sm:$0xff]
    %v228 = vld [vmem:[#allocation2 + $0x430] sm:$0xff]
    %v229 = vld [vmem:[#allocation2 + $0x438] sm:$0xff]
    %v230 = vld [vmem:[#allocation2 + $0x440] sm:$0xff]
    %v231 = vld [vmem:[#allocation2 + $0x448] sm:$0xff]
    %v232 = vld [vmem:[#allocation2 + $0x450] sm:$0xff]
    %v233 = vld [vmem:[#allocation2 + $0x458] sm:$0xff]
    %v234 = vld [vmem:[#allocation2 + $0x460] sm:$0xff]
    %v235 = vld [vmem:[#allocation2 + $0x468] sm:$0xff]
    %v236 = vld [vmem:[#allocation2 + $0x470] sm:$0xff]
    %v237 = vld [vmem:[#allocation2 + $0x478] sm:$0xff]
    %v238 = vld [vmem:[#allocation2 + $0x480] sm:$0xff]
    %v239 = vld [vmem:[#allocation2 + $0x488] sm:$0xff]
    %v240 = vld [vmem:[#allocation2 + $0x490] sm:$0xff]
    %v241 = vld [vmem:[#allocation2 + $0x498] sm:$0xff]
    %v242 = vld [vmem:[#allocation2 + $0x4a0] sm:$0xff]
    %v243 = vld [vmem:[#allocation2 + $0x4a8] sm:$0xff]
    %v244 = vld [vmem:[#allocation2 + $0x4b0] sm:$0xff]
    %v245 = vld [vmem:[#allocation2 + $0x4b8] sm:$0xff]
    %v246 = vld [vmem:[#allocation2 + $0x4c0] sm:$0xff]
    %v247 = vld [vmem:[#allocation2 + $0x4c8] sm:$0xff]
    %v248 = vld [vmem:[#allocation2 + $0x4d0] sm:$0xff]
    %v249 = vld [vmem:[#allocation2 + $0x4d8] sm:$0xff]
    %v250 = vld [vmem:[#allocation2 + $0x4e0] sm:$0xff]
    %v251 = vld [vmem:[#allocation2 + $0x4e8] sm:$0xff]
    %v252 = vld [vmem:[#allocation2 + $0x4f0] sm:$0xff]
    %v253 = vld [vmem:[#allocation2 + $0x4f8] sm:$0xff]
    %v254 = vld [vmem:[#allocation2 + $0x500] sm:$0xff]
    %v255 = vld [vmem:[#allocation2 + $0x508] sm:$0xff]
    %v256 = vld [vmem:[#allocation2 + $0x510] sm:$0xff]
    %v257 = vld [vmem:[#allocation2 + $0x518] sm:$0xff]
    %v258 = vld [vmem:[#allocation2 + $0x520] sm:$0xff]
    %v259 = vld [vmem:[#allocation2 + $0x528] sm:$0xff]
    %v260 = vld [vmem:[#allocation2 + $0x530] sm:$0xff]
    %v261 = vld [vmem:[#allocation2 + $0x538] sm:$0xff]
    %v262 = vld [vmem:[#allocation2 + $0x540] sm:$0xff]
    %v263 = vld [vmem:[#allocation2 + $0x548] sm:$0xff]
    %v264 = vld [vmem:[#allocation2 + $0x550] sm:$0xff]
    %v265 = vld [vmem:[#allocation2 + $0x558] sm:$0xff]
    %v266 = vld [vmem:[#allocation2 + $0x560] sm:$0xff]
    %v267 = vld [vmem:[#allocation2 + $0x568] sm:$0xff]
    %v268 = vld [vmem:[#allocation2 + $0x570] sm:$0xff]
    %v269 = vld [vmem:[#allocation2 + $0x578] sm:$0xff]
    %v270 = vld [vmem:[#allocation2 + $0x580] sm:$0xff]
    %v271 = vld [vmem:[#allocation2 + $0x588] sm:$0xff]
    %v272 = vld [vmem:[#allocation2 + $0x590] sm:$0xff]
    %v273 = vld [vmem:[#allocation2 + $0x598] sm:$0xff]
    %v274 = vld [vmem:[#allocation2 + $0x5a0] sm:$0xff]
    %v275 = vld [vmem:[#allocation2 + $0x5a8] sm:$0xff]
    %v276 = vld [vmem:[#allocation2 + $0x5b0] sm:$0xff]
    %v277 = vld [vmem:[#allocation2 + $0x5b8] sm:$0xff]
    %v278 = vld [vmem:[#allocation2 + $0x5c0] sm:$0xff]
    %v279 = vld [vmem:[#allocation2 + $0x5c8] sm:$0xff]
    %v280 = vld [vmem:[#allocation2 + $0x5d0] sm:$0xff]
    %v281 = vld [vmem:[#allocation2 + $0x5d8] sm:$0xff]
    %v282 = vld [vmem:[#allocation2 + $0x5e0] sm:$0xff]
    %v283 = vld [vmem:[#allocation2 + $0x5e8] sm:$0xff]
    %v284 = vld [vmem:[#allocation2 + $0x5f0] sm:$0xff]
    %v285 = vld [vmem:[#allocation2 + $0x5f8] sm:$0xff]
    %v292 = vunpack.c.l.b16 %v82
    %v293 = vunpack.c.h.b16 %v82
    %v294 = vunpack.c.l.b16 %v83
    %v295 = vunpack.c.h.b16 %v83
    %v296 = vunpack.c.l.b16 %v84
    %v297 = vunpack.c.h.b16 %v84
    %v298 = vunpack.c.l.b16 %v85
    %v299 = vunpack.c.h.b16 %v85
    %v300 = vunpack.c.l.b16 %v86
    %v301 = vunpack.c.h.b16 %v86
    %v302 = vunpack.c.l.b16 %v87
    %v303 = vunpack.c.h.b16 %v87
    %v304 = vpack.c.b16 %v292, %v292
    %v305 = vpack.c.b16 %v293, %v293
    %v306 = vpack.c.b16 %v294, %v294
    %v307 = vpack.c.b16 %v295, %v295
    %v308 = vpack.c.b16 %v296, %v296
    %v309 = vpack.c.b16 %v297, %v297
    %v310 = vpack.c.b16 %v298, %v298
    %v311 = vpack.c.b16 %v299, %v299
    %v312 = vpack.c.b16 %v300, %v300
    %v313 = vpack.c.b16 %v301, %v301
    %v314 = vpack.c.b16 %v302, %v302
    %v315 = vpack.c.b16 %v303, %v303
    %v520 = vunpack.c.l.b16 %v94
    %v521 = vunpack.c.h.b16 %v94
    %v522 = vunpack.c.l.b16 %v95
    %v523 = vunpack.c.h.b16 %v95
    %v524 = vunpack.c.l.b16 %v96
    %v525 = vunpack.c.h.b16 %v96
    %v526 = vunpack.c.l.b16 %v97
    %v527 = vunpack.c.h.b16 %v97
    %v528 = vunpack.c.l.b16 %v98
    %v529 = vunpack.c.h.b16 %v98
    %v530 = vunpack.c.l.b16 %v99
    %v531 = vunpack.c.h.b16 %v99
    %v532 = vunpack.c.l.b16 %v100
    %v533 = vunpack.c.h.b16 %v100
    %v534 = vunpack.c.l.b16 %v101
    %v535 = vunpack.c.h.b16 %v101
    %v536 = vunpack.c.l.b16 %v102
    %v537 = vunpack.c.h.b16 %v102
    %v538 = vunpack.c.l.b16 %v103
    %v539 = vunpack.c.h.b16 %v103
    %v540 = vunpack.c.l.b16 %v104
    %v541 = vunpack.c.h.b16 %v104
    %v542 = vunpack.c.l.b16 %v105
    %v543 = vunpack.c.h.b16 %v105
    %v544 = vunpack.c.l.b16 %v106
    %v545 = vunpack.c.h.b16 %v106
    %v546 = vunpack.c.l.b16 %v107
    %v547 = vunpack.c.h.b16 %v107
    %v548 = vunpack.c.l.b16 %v108
    %v549 = vunpack.c.h.b16 %v108
    %v550 = vunpack.c.l.b16 %v109
    %v551 = vunpack.c.h.b16 %v109
    %v552 = vunpack.c.l.b16 %v110
    %v553 = vunpack.c.h.b16 %v110
    %v554 = vunpack.c.l.b16 %v111
    %v555 = vunpack.c.h.b16 %v111
    %v556 = vunpack.c.l.b16 %v112
    %v557 = vunpack.c.h.b16 %v112
    %v558 = vunpack.c.l.b16 %v113
    %v559 = vunpack.c.h.b16 %v113
    %v560 = vunpack.c.l.b16 %v114
    %v561 = vunpack.c.h.b16 %v114
    %v562 = vunpack.c.l.b16 %v115
    %v563 = vunpack.c.h.b16 %v115
    %v564 = vunpack.c.l.b16 %v116
    %v565 = vunpack.c.h.b16 %v116
    %v566 = vunpack.c.l.b16 %v117
    %v567 = vunpack.c.h.b16 %v117
    %v568 = vunpack.c.l.b16 %v118
    %v569 = vunpack.c.h.b16 %v118
    %v570 = vunpack.c.l.b16 %v119
    %v571 = vunpack.c.h.b16 %v119
    %v572 = vunpack.c.l.b16 %v120
    %v573 = vunpack.c.h.b16 %v120
    %v574 = vunpack.c.l.b16 %v121
    %v575 = vunpack.c.h.b16 %v121
    %v576 = vunpack.c.l.b16 %v122
    %v577 = vunpack.c.h.b16 %v122
    %v578 = vunpack.c.l.b16 %v123
    %v579 = vunpack.c.h.b16 %v123
    %v580 = vunpack.c.l.b16 %v124
    %v581 = vunpack.c.h.b16 %v124
    %v582 = vunpack.c.l.b16 %v125
    %v583 = vunpack.c.h.b16 %v125
    %v584 = vunpack.c.l.b16 %v126
    %v585 = vunpack.c.h.b16 %v126
    %v586 = vunpack.c.l.b16 %v127
    %v587 = vunpack.c.h.b16 %v127
    %v588 = vunpack.c.l.b16 %v128
    %v589 = vunpack.c.h.b16 %v128
    %v590 = vunpack.c.l.b16 %v129
    %v591 = vunpack.c.h.b16 %v129
    %v592 = vunpack.c.l.b16 %v130
    %v593 = vunpack.c.h.b16 %v130
    %v594 = vunpack.c.l.b16 %v131
    %v595 = vunpack.c.h.b16 %v131
    %v596 = vunpack.c.l.b16 %v132
    %v597 = vunpack.c.h.b16 %v132
    %v598 = vunpack.c.l.b16 %v133
    %v599 = vunpack.c.h.b16 %v133
    %v600 = vunpack.c.l.b16 %v134
    %v601 = vunpack.c.h.b16 %v134
    %v602 = vunpack.c.l.b16 %v135
    %v603 = vunpack.c.h.b16 %v135
    %v604 = vunpack.c.l.b16 %v136
    %v605 = vunpack.c.h.b16 %v136
    %v606 = vunpack.c.l.b16 %v137
    %v607 = vunpack.c.h.b16 %v137
    %v608 = vunpack.c.l.b16 %v138
    %v609 = vunpack.c.h.b16 %v138
    %v610 = vunpack.c.l.b16 %v139
    %v611 = vunpack.c.h.b16 %v139
    %v612 = vunpack.c.l.b16 %v140
    %v613 = vunpack.c.h.b16 %v140
    %v614 = vunpack.c.l.b16 %v141
    %v615 = vunpack.c.h.b16 %v141
    %v616 = vunpack.c.l.b16 %v142
    %v617 = vunpack.c.h.b16 %v142
    %v618 = vunpack.c.l.b16 %v143
    %v619 = vunpack.c.h.b16 %v143
    %v620 = vunpack.c.l.b16 %v144
    %v621 = vunpack.c.h.b16 %v144
    %v622 = vunpack.c.l.b16 %v145
    %v623 = vunpack.c.h.b16 %v145
    %v624 = vunpack.c.l.b16 %v146
    %v625 = vunpack.c.h.b16 %v146
    %v626 = vunpack.c.l.b16 %v147
    %v627 = vunpack.c.h.b16 %v147
    %v628 = vunpack.c.l.b16 %v148
    %v629 = vunpack.c.h.b16 %v148
    %v630 = vunpack.c.l.b16 %v149
    %v631 = vunpack.c.h.b16 %v149
    %v632 = vunpack.c.l.b16 %v150
    %v633 = vunpack.c.h.b16 %v150
    %v634 = vunpack.c.l.b16 %v151
    %v635 = vunpack.c.h.b16 %v151
    %v636 = vunpack.c.l.b16 %v152
    %v637 = vunpack.c.h.b16 %v152
    %v638 = vunpack.c.l.b16 %v153
    %v639 = vunpack.c.h.b16 %v153
    %v640 = vunpack.c.l.b16 %v154
    %v641 = vunpack.c.h.b16 %v154
    %v642 = vunpack.c.l.b16 %v155
    %v643 = vunpack.c.h.b16 %v155
    %v644 = vunpack.c.l.b16 %v156
    %v645 = vunpack.c.h.b16 %v156
    %v646 = vunpack.c.l.b16 %v157
    %v647 = vunpack.c.h.b16 %v157
    %v648 = vunpack.c.l.b16 %v158
    %v649 = vunpack.c.h.b16 %v158
    %v650 = vunpack.c.l.b16 %v159
    %v651 = vunpack.c.h.b16 %v159
    %v652 = vunpack.c.l.b16 %v160
    %v653 = vunpack.c.h.b16 %v160
    %v654 = vunpack.c.l.b16 %v161
    %v655 = vunpack.c.h.b16 %v161
    %v656 = vunpack.c.l.b16 %v162
    %v657 = vunpack.c.h.b16 %v162
    %v658 = vunpack.c.l.b16 %v163
    %v659 = vunpack.c.h.b16 %v163
    %v660 = vunpack.c.l.b16 %v164
    %v661 = vunpack.c.h.b16 %v164
    %v662 = vunpack.c.l.b16 %v165
    %v663 = vunpack.c.h.b16 %v165
    %v664 = vunpack.c.l.b16 %v166
    %v665 = vunpack.c.h.b16 %v166
    %v666 = vunpack.c.l.b16 %v167
    %v667 = vunpack.c.h.b16 %v167
    %v668 = vunpack.c.l.b16 %v168
    %v669 = vunpack.c.h.b16 %v168
    %v670 = vunpack.c.l.b16 %v169
    %v671 = vunpack.c.h.b16 %v169
    %v672 = vunpack.c.l.b16 %v170
    %v673 = vunpack.c.h.b16 %v170
    %v674 = vunpack.c.l.b16 %v171
    %v675 = vunpack.c.h.b16 %v171
    %v676 = vunpack.c.l.b16 %v172
    %v677 = vunpack.c.h.b16 %v172
    %v678 = vunpack.c.l.b16 %v173
    %v679 = vunpack.c.h.b16 %v173
    %v680 = vunpack.c.l.b16 %v174
    %v681 = vunpack.c.h.b16 %v174
    %v682 = vunpack.c.l.b16 %v175
    %v683 = vunpack.c.h.b16 %v175
    %v684 = vunpack.c.l.b16 %v176
    %v685 = vunpack.c.h.b16 %v176
    %v686 = vunpack.c.l.b16 %v177
    %v687 = vunpack.c.h.b16 %v177
    %v688 = vunpack.c.l.b16 %v178
    %v689 = vunpack.c.h.b16 %v178
    %v690 = vunpack.c.l.b16 %v179
    %v691 = vunpack.c.h.b16 %v179
    %v692 = vunpack.c.l.b16 %v180
    %v693 = vunpack.c.h.b16 %v180
    %v694 = vunpack.c.l.b16 %v181
    %v695 = vunpack.c.h.b16 %v181
    %v696 = vunpack.c.l.b16 %v182
    %v697 = vunpack.c.h.b16 %v182
    %v698 = vunpack.c.l.b16 %v183
    %v699 = vunpack.c.h.b16 %v183
    %v700 = vunpack.c.l.b16 %v184
    %v701 = vunpack.c.h.b16 %v184
    %v702 = vunpack.c.l.b16 %v185
    %v703 = vunpack.c.h.b16 %v185
    %v704 = vunpack.c.l.b16 %v186
    %v705 = vunpack.c.h.b16 %v186
    %v706 = vunpack.c.l.b16 %v187
    %v707 = vunpack.c.h.b16 %v187
    %v708 = vunpack.c.l.b16 %v188
    %v709 = vunpack.c.h.b16 %v188
    %v710 = vunpack.c.l.b16 %v189
    %v711 = vunpack.c.h.b16 %v189
    %v712 = vunpack.c.l.b16 %v190
    %v713 = vunpack.c.h.b16 %v190
    %v714 = vunpack.c.l.b16 %v191
    %v715 = vunpack.c.h.b16 %v191
    %v716 = vunpack.c.l.b16 %v192
    %v717 = vunpack.c.h.b16 %v192
    %v718 = vunpack.c.l.b16 %v193
    %v719 = vunpack.c.h.b16 %v193
    %v720 = vunpack.c.l.b16 %v194
    %v721 = vunpack.c.h.b16 %v194
    %v722 = vunpack.c.l.b16 %v195
    %v723 = vunpack.c.h.b16 %v195
    %v724 = vunpack.c.l.b16 %v196
    %v725 = vunpack.c.h.b16 %v196
    %v726 = vunpack.c.l.b16 %v197
    %v727 = vunpack.c.h.b16 %v197
    %v728 = vunpack.c.l.b16 %v198
    %v729 = vunpack.c.h.b16 %v198
    %v730 = vunpack.c.l.b16 %v199
    %v731 = vunpack.c.h.b16 %v199
    %v732 = vunpack.c.l.b16 %v200
    %v733 = vunpack.c.h.b16 %v200
    %v734 = vunpack.c.l.b16 %v201
    %v735 = vunpack.c.h.b16 %v201
    %v736 = vunpack.c.l.b16 %v202
    %v737 = vunpack.c.h.b16 %v202
    %v738 = vunpack.c.l.b16 %v203
    %v739 = vunpack.c.h.b16 %v203
    %v740 = vunpack.c.l.b16 %v204
    %v741 = vunpack.c.h.b16 %v204
    %v742 = vunpack.c.l.b16 %v205
    %v743 = vunpack.c.h.b16 %v205
    %v744 = vunpack.c.l.b16 %v206
    %v745 = vunpack.c.h.b16 %v206
    %v746 = vunpack.c.l.b16 %v207
    %v747 = vunpack.c.h.b16 %v207
    %v748 = vunpack.c.l.b16 %v208
    %v749 = vunpack.c.h.b16 %v208
    %v750 = vunpack.c.l.b16 %v209
    %v751 = vunpack.c.h.b16 %v209
    %v752 = vunpack.c.l.b16 %v210
    %v753 = vunpack.c.h.b16 %v210
    %v754 = vunpack.c.l.b16 %v211
    %v755 = vunpack.c.h.b16 %v211
    %v756 = vunpack.c.l.b16 %v212
    %v757 = vunpack.c.h.b16 %v212
    %v758 = vunpack.c.l.b16 %v213
    %v759 = vunpack.c.h.b16 %v213
    %v760 = vunpack.c.l.b16 %v214
    %v761 = vunpack.c.h.b16 %v214
    %v762 = vunpack.c.l.b16 %v215
    %v763 = vunpack.c.h.b16 %v215
    %v764 = vunpack.c.l.b16 %v216
    %v765 = vunpack.c.h.b16 %v216
    %v766 = vunpack.c.l.b16 %v217
    %v767 = vunpack.c.h.b16 %v217
    %v768 = vunpack.c.l.b16 %v218
    %v769 = vunpack.c.h.b16 %v218
    %v770 = vunpack.c.l.b16 %v219
    %v771 = vunpack.c.h.b16 %v219
    %v772 = vunpack.c.l.b16 %v220
    %v773 = vunpack.c.h.b16 %v220
    %v774 = vunpack.c.l.b16 %v221
    %v775 = vunpack.c.h.b16 %v221
    %v776 = vunpack.c.l.b16 %v222
    %v777 = vunpack.c.h.b16 %v222
    %v778 = vunpack.c.l.b16 %v223
    %v779 = vunpack.c.h.b16 %v223
    %v780 = vunpack.c.l.b16 %v224
    %v781 = vunpack.c.h.b16 %v224
    %v782 = vunpack.c.l.b16 %v225
    %v783 = vunpack.c.h.b16 %v225
    %v784 = vunpack.c.l.b16 %v226
    %v785 = vunpack.c.h.b16 %v226
    %v786 = vunpack.c.l.b16 %v227
    %v787 = vunpack.c.h.b16 %v227
    %v788 = vunpack.c.l.b16 %v228
    %v789 = vunpack.c.h.b16 %v228
    %v790 = vunpack.c.l.b16 %v229
    %v791 = vunpack.c.h.b16 %v229
    %v792 = vunpack.c.l.b16 %v230
    %v793 = vunpack.c.h.b16 %v230
    %v794 = vunpack.c.l.b16 %v231
    %v795 = vunpack.c.h.b16 %v231
    %v796 = vunpack.c.l.b16 %v232
    %v797 = vunpack.c.h.b16 %v232
    %v798 = vunpack.c.l.b16 %v233
    %v799 = vunpack.c.h.b16 %v233
    %v800 = vunpack.c.l.b16 %v234
    %v801 = vunpack.c.h.b16 %v234
    %v802 = vunpack.c.l.b16 %v235
    %v803 = vunpack.c.h.b16 %v235
    %v804 = vunpack.c.l.b16 %v236
    %v805 = vunpack.c.h.b16 %v236
    %v806 = vunpack.c.l.b16 %v237
    %v807 = vunpack.c.h.b16 %v237
    %v808 = vunpack.c.l.b16 %v238
    %v809 = vunpack.c.h.b16 %v238
    %v810 = vunpack.c.l.b16 %v239
    %v811 = vunpack.c.h.b16 %v239
    %v812 = vunpack.c.l.b16 %v240
    %v813 = vunpack.c.h.b16 %v240
    %v814 = vunpack.c.l.b16 %v241
    %v815 = vunpack.c.h.b16 %v241
    %v816 = vunpack.c.l.b16 %v242
    %v817 = vunpack.c.h.b16 %v242
    %v818 = vunpack.c.l.b16 %v243
    %v819 = vunpack.c.h.b16 %v243
    %v820 = vunpack.c.l.b16 %v244
    %v821 = vunpack.c.h.b16 %v244
    %v822 = vunpack.c.l.b16 %v245
    %v823 = vunpack.c.h.b16 %v245
    %v824 = vunpack.c.l.b16 %v246
    %v825 = vunpack.c.h.b16 %v246
    %v826 = vunpack.c.l.b16 %v247
    %v827 = vunpack.c.h.b16 %v247
    %v828 = vunpack.c.l.b16 %v248
    %v829 = vunpack.c.h.b16 %v248
    %v830 = vunpack.c.l.b16 %v249
    %v831 = vunpack.c.h.b16 %v249
    %v832 = vunpack.c.l.b16 %v250
    %v833 = vunpack.c.h.b16 %v250
    %v834 = vunpack.c.l.b16 %v251
    %v835 = vunpack.c.h.b16 %v251
    %v836 = vunpack.c.l.b16 %v252
    %v837 = vunpack.c.h.b16 %v252
    %v838 = vunpack.c.l.b16 %v253
    %v839 = vunpack.c.h.b16 %v253
    %v840 = vunpack.c.l.b16 %v254
    %v841 = vunpack.c.h.b16 %v254
    %v842 = vunpack.c.l.b16 %v255
    %v843 = vunpack.c.h.b16 %v255
    %v844 = vunpack.c.l.b16 %v256
    %v845 = vunpack.c.h.b16 %v256
    %v846 = vunpack.c.l.b16 %v257
    %v847 = vunpack.c.h.b16 %v257
    %v848 = vunpack.c.l.b16 %v258
    %v849 = vunpack.c.h.b16 %v258
    %v850 = vunpack.c.l.b16 %v259
    %v851 = vunpack.c.h.b16 %v259
    %v852 = vunpack.c.l.b16 %v260
    %v853 = vunpack.c.h.b16 %v260
    %v854 = vunpack.c.l.b16 %v261
    %v855 = vunpack.c.h.b16 %v261
    %v856 = vunpack.c.l.b16 %v262
    %v857 = vunpack.c.h.b16 %v262
    %v858 = vunpack.c.l.b16 %v263
    %v859 = vunpack.c.h.b16 %v263
    %v860 = vunpack.c.l.b16 %v264
    %v861 = vunpack.c.h.b16 %v264
    %v862 = vunpack.c.l.b16 %v265
    %v863 = vunpack.c.h.b16 %v265
    %v864 = vunpack.c.l.b16 %v266
    %v865 = vunpack.c.h.b16 %v266
    %v866 = vunpack.c.l.b16 %v267
    %v867 = vunpack.c.h.b16 %v267
    %v868 = vunpack.c.l.b16 %v268
    %v869 = vunpack.c.h.b16 %v268
    %v870 = vunpack.c.l.b16 %v269
    %v871 = vunpack.c.h.b16 %v269
    %v872 = vunpack.c.l.b16 %v270
    %v873 = vunpack.c.h.b16 %v270
    %v874 = vunpack.c.l.b16 %v271
    %v875 = vunpack.c.h.b16 %v271
    %v876 = vunpack.c.l.b16 %v272
    %v877 = vunpack.c.h.b16 %v272
    %v878 = vunpack.c.l.b16 %v273
    %v879 = vunpack.c.h.b16 %v273
    %v880 = vunpack.c.l.b16 %v274
    %v881 = vunpack.c.h.b16 %v274
    %v882 = vunpack.c.l.b16 %v275
    %v883 = vunpack.c.h.b16 %v275
    %v884 = vunpack.c.l.b16 %v276
    %v885 = vunpack.c.h.b16 %v276
    %v886 = vunpack.c.l.b16 %v277
    %v887 = vunpack.c.h.b16 %v277
    %v888 = vunpack.c.l.b16 %v278
    %v889 = vunpack.c.h.b16 %v278
    %v890 = vunpack.c.l.b16 %v279
    %v891 = vunpack.c.h.b16 %v279
    %v892 = vunpack.c.l.b16 %v280
    %v893 = vunpack.c.h.b16 %v280
    %v894 = vunpack.c.l.b16 %v281
    %v895 = vunpack.c.h.b16 %v281
    %v896 = vunpack.c.l.b16 %v282
    %v897 = vunpack.c.h.b16 %v282
    %v898 = vunpack.c.l.b16 %v283
    %v899 = vunpack.c.h.b16 %v283
    %v900 = vunpack.c.l.b16 %v284
    %v901 = vunpack.c.h.b16 %v284
    %v902 = vunpack.c.l.b16 %v285
    %v903 = vunpack.c.h.b16 %v285
    %v904 = vpack.c.b16 %v522, %v520
    %v905 = vpack.c.b16 %v523, %v521
    %v906 = vpack.c.b16 %v526, %v524
    %v907 = vpack.c.b16 %v527, %v525
    %v908 = vpack.c.b16 %v530, %v528
    %v909 = vpack.c.b16 %v531, %v529
    %v910 = vpack.c.b16 %v534, %v532
    %v911 = vpack.c.b16 %v535, %v533
    %v912 = vpack.c.b16 %v538, %v536
    %v913 = vpack.c.b16 %v539, %v537
    %v914 = vpack.c.b16 %v542, %v540
    %v915 = vpack.c.b16 %v543, %v541
    %v916 = vpack.c.b16 %v546, %v544
    %v917 = vpack.c.b16 %v547, %v545
    %v918 = vpack.c.b16 %v550, %v548
    %v919 = vpack.c.b16 %v551, %v549
    %v920 = vpack.c.b16 %v554, %v552
    %v921 = vpack.c.b16 %v555, %v553
    %v922 = vpack.c.b16 %v558, %v556
    %v923 = vpack.c.b16 %v559, %v557
    %v924 = vpack.c.b16 %v562, %v560
    %v925 = vpack.c.b16 %v563, %v561
    %v926 = vpack.c.b16 %v566, %v564
    %v927 = vpack.c.b16 %v567, %v565
    %v928 = vpack.c.b16 %v570, %v568
    %v929 = vpack.c.b16 %v571, %v569
    %v930 = vpack.c.b16 %v574, %v572
    %v931 = vpack.c.b16 %v575, %v573
    %v932 = vpack.c.b16 %v578, %v576
    %v933 = vpack.c.b16 %v579, %v577
    %v934 = vpack.c.b16 %v582, %v580
    %v935 = vpack.c.b16 %v583, %v581
    %v936 = vpack.c.b16 %v586, %v584
    %v937 = vpack.c.b16 %v587, %v585
    %v938 = vpack.c.b16 %v590, %v588
    %v939 = vpack.c.b16 %v591, %v589
    %v940 = vpack.c.b16 %v594, %v592
    %v941 = vpack.c.b16 %v595, %v593
    %v942 = vpack.c.b16 %v598, %v596
    %v943 = vpack.c.b16 %v599, %v597
    %v944 = vpack.c.b16 %v602, %v600
    %v945 = vpack.c.b16 %v603, %v601
    %v946 = vpack.c.b16 %v606, %v604
    %v947 = vpack.c.b16 %v607, %v605
    %v948 = vpack.c.b16 %v610, %v608
    %v949 = vpack.c.b16 %v611, %v609
    %v950 = vpack.c.b16 %v614, %v612
    %v951 = vpack.c.b16 %v615, %v613
    %v952 = vpack.c.b16 %v618, %v616
    %v953 = vpack.c.b16 %v619, %v617
    %v954 = vpack.c.b16 %v622, %v620
    %v955 = vpack.c.b16 %v623, %v621
    %v956 = vpack.c.b16 %v626, %v624
    %v957 = vpack.c.b16 %v627, %v625
    %v958 = vpack.c.b16 %v630, %v628
    %v959 = vpack.c.b16 %v631, %v629
    %v960 = vpack.c.b16 %v634, %v632
    %v961 = vpack.c.b16 %v635, %v633
    %v962 = vpack.c.b16 %v638, %v636
    %v963 = vpack.c.b16 %v639, %v637
    %v964 = vpack.c.b16 %v642, %v640
    %v965 = vpack.c.b16 %v643, %v641
    %v966 = vpack.c.b16 %v646, %v644
    %v967 = vpack.c.b16 %v647, %v645
    %v968 = vpack.c.b16 %v650, %v648
    %v969 = vpack.c.b16 %v651, %v649
    %v970 = vpack.c.b16 %v654, %v652
    %v971 = vpack.c.b16 %v655, %v653
    %v972 = vpack.c.b16 %v658, %v656
    %v973 = vpack.c.b16 %v659, %v657
    %v974 = vpack.c.b16 %v662, %v660
    %v975 = vpack.c.b16 %v663, %v661
    %v976 = vpack.c.b16 %v666, %v664
    %v977 = vpack.c.b16 %v667, %v665
    %v978 = vpack.c.b16 %v670, %v668
    %v979 = vpack.c.b16 %v671, %v669
    %v980 = vpack.c.b16 %v674, %v672
    %v981 = vpack.c.b16 %v675, %v673
    %v982 = vpack.c.b16 %v678, %v676
    %v983 = vpack.c.b16 %v679, %v677
    %v984 = vpack.c.b16 %v682, %v680
    %v985 = vpack.c.b16 %v683, %v681
    %v986 = vpack.c.b16 %v686, %v684
    %v987 = vpack.c.b16 %v687, %v685
    %v988 = vpack.c.b16 %v690, %v688
    %v989 = vpack.c.b16 %v691, %v689
    %v990 = vpack.c.b16 %v694, %v692
    %v991 = vpack.c.b16 %v695, %v693
    %v992 = vpack.c.b16 %v698, %v696
    %v993 = vpack.c.b16 %v699, %v697
    %v994 = vpack.c.b16 %v702, %v700
    %v995 = vpack.c.b16 %v703, %v701
    %v996 = vpack.c.b16 %v706, %v704
    %v997 = vpack.c.b16 %v707, %v705
    %v998 = vpack.c.b16 %v710, %v708
    %v999 = vpack.c.b16 %v711, %v709
    %v1000 = vpack.c.b16 %v714, %v712
    %v1001 = vpack.c.b16 %v715, %v713
    %v1002 = vpack.c.b16 %v718, %v716
    %v1003 = vpack.c.b16 %v719, %v717
    %v1004 = vpack.c.b16 %v722, %v720
    %v1005 = vpack.c.b16 %v723, %v721
    %v1006 = vpack.c.b16 %v726, %v724
    %v1007 = vpack.c.b16 %v727, %v725
    %v1008 = vpack.c.b16 %v730, %v728
    %v1009 = vpack.c.b16 %v731, %v729
    %v1010 = vpack.c.b16 %v734, %v732
    %v1011 = vpack.c.b16 %v735, %v733
    %v1012 = vpack.c.b16 %v738, %v736
    %v1013 = vpack.c.b16 %v739, %v737
    %v1014 = vpack.c.b16 %v742, %v740
    %v1015 = vpack.c.b16 %v743, %v741
    %v1016 = vpack.c.b16 %v746, %v744
    %v1017 = vpack.c.b16 %v747, %v745
    %v1018 = vpack.c.b16 %v750, %v748
    %v1019 = vpack.c.b16 %v751, %v749
    %v1020 = vpack.c.b16 %v754, %v752
    %v1021 = vpack.c.b16 %v755, %v753
    %v1022 = vpack.c.b16 %v758, %v756
    %v1023 = vpack.c.b16 %v759, %v757
    %v1024 = vpack.c.b16 %v762, %v760
    %v1025 = vpack.c.b16 %v763, %v761
    %v1026 = vpack.c.b16 %v766, %v764
    %v1027 = vpack.c.b16 %v767, %v765
    %v1028 = vpack.c.b16 %v770, %v768
    %v1029 = vpack.c.b16 %v771, %v769
    %v1030 = vpack.c.b16 %v774, %v772
    %v1031 = vpack.c.b16 %v775, %v773
    %v1032 = vpack.c.b16 %v778, %v776
    %v1033 = vpack.c.b16 %v779, %v777
    %v1034 = vpack.c.b16 %v782, %v780
    %v1035 = vpack.c.b16 %v783, %v781
    %v1036 = vpack.c.b16 %v786, %v784
    %v1037 = vpack.c.b16 %v787, %v785
    %v1038 = vpack.c.b16 %v790, %v788
    %v1039 = vpack.c.b16 %v791, %v789
    %v1040 = vpack.c.b16 %v794, %v792
    %v1041 = vpack.c.b16 %v795, %v793
    %v1042 = vpack.c.b16 %v798, %v796
    %v1043 = vpack.c.b16 %v799, %v797
    %v1044 = vpack.c.b16 %v802, %v800
    %v1045 = vpack.c.b16 %v803, %v801
    %v1046 = vpack.c.b16 %v806, %v804
    %v1047 = vpack.c.b16 %v807, %v805
    %v1048 = vpack.c.b16 %v810, %v808
    %v1049 = vpack.c.b16 %v811, %v809
    %v1050 = vpack.c.b16 %v814, %v812
    %v1051 = vpack.c.b16 %v815, %v813
    %v1052 = vpack.c.b16 %v818, %v816
    %v1053 = vpack.c.b16 %v819, %v817
    %v1054 = vpack.c.b16 %v822, %v820
    %v1055 = vpack.c.b16 %v823, %v821
    %v1056 = vpack.c.b16 %v826, %v824
    %v1057 = vpack.c.b16 %v827, %v825
    %v1058 = vpack.c.b16 %v830, %v828
    %v1059 = vpack.c.b16 %v831, %v829
    %v1060 = vpack.c.b16 %v834, %v832
    %v1061 = vpack.c.b16 %v835, %v833
    %v1062 = vpack.c.b16 %v838, %v836
    %v1063 = vpack.c.b16 %v839, %v837
    %v1064 = vpack.c.b16 %v842, %v840
    %v1065 = vpack.c.b16 %v843, %v841
    %v1066 = vpack.c.b16 %v846, %v844
    %v1067 = vpack.c.b16 %v847, %v845
    %v1068 = vpack.c.b16 %v850, %v848
    %v1069 = vpack.c.b16 %v851, %v849
    %v1070 = vpack.c.b16 %v854, %v852
    %v1071 = vpack.c.b16 %v855, %v853
    %v1072 = vpack.c.b16 %v858, %v856
    %v1073 = vpack.c.b16 %v859, %v857
    %v1074 = vpack.c.b16 %v862, %v860
    %v1075 = vpack.c.b16 %v863, %v861
    %v1076 = vpack.c.b16 %v866, %v864
    %v1077 = vpack.c.b16 %v867, %v865
    %v1078 = vpack.c.b16 %v870, %v868
    %v1079 = vpack.c.b16 %v871, %v869
    %v1080 = vpack.c.b16 %v874, %v872
    %v1081 = vpack.c.b16 %v875, %v873
    %v1082 = vpack.c.b16 %v878, %v876
    %v1083 = vpack.c.b16 %v879, %v877
    %v1084 = vpack.c.b16 %v882, %v880
    %v1085 = vpack.c.b16 %v883, %v881
    %v1086 = vpack.c.b16 %v886, %v884
    %v1087 = vpack.c.b16 %v887, %v885
    %v1088 = vpack.c.b16 %v890, %v888
    %v1089 = vpack.c.b16 %v891, %v889
    %v1090 = vpack.c.b16 %v894, %v892
    %v1091 = vpack.c.b16 %v895, %v893
    %v1092 = vpack.c.b16 %v898, %v896
    %v1093 = vpack.c.b16 %v899, %v897
    %v1094 = vpack.c.b16 %v902, %v900
    %v1095 = vpack.c.b16 %v903, %v901
    %1288 = vmatpush.bf16.msra.mxu0 %v918
    %1289 = vmatpush.bf16.msra.mxu0 %v916
    %1290 = vmatpush.bf16.msra.mxu0 %v914
    %1291 = vmatpush.bf16.msra.mxu0 %v912
    %1292 = vmatpush.bf16.msra.mxu0 %v910
    %1293 = vmatpush.bf16.msra.mxu0 %v908
    %1294 = vmatpush.bf16.msra.mxu0 %v906
    %1295 = vmatpush.bf16.msra.mxu0 %v904
    %1296 = vmatmul.bf16.gmra.mxu0 %v304
    %v1297 = vpop.f32.mrf.mxu0
    %v1298 = vadd.f32 0.0, %v1297
    %v1299 = vpop.f32.mrf.mxu0
    %1300 = vdwg.mxu0
    %1301 = vmatpush.bf16.msra.mxu0 %v934
    %1302 = vmatpush.bf16.msra.mxu0 %v932
    %1303 = vmatpush.bf16.msra.mxu0 %v930
    %1304 = vmatpush.bf16.msra.mxu0 %v928
    %1305 = vmatpush.bf16.msra.mxu0 %v926
    %1306 = vmatpush.bf16.msra.mxu0 %v924
    %1307 = vmatpush.bf16.msra.mxu0 %v922
    %1308 = vmatpush.bf16.msra.mxu0 %v920
    %1309 = vmatmul.bf16.gmra.mxu0 %v305
    %v1310 = vpop.f32.mrf.mxu0
    %v1311 = vadd.f32 %v1298, %v1310
    %v1312 = vpop.f32.mrf.mxu0
    %1313 = vdwg.mxu0
    %1314 = vmatpush.bf16.msra.mxu0 %v950
    %1315 = vmatpush.bf16.msra.mxu0 %v948
    %1316 = vmatpush.bf16.msra.mxu0 %v946
    %1317 = vmatpush.bf16.msra.mxu0 %v944
    %1318 = vmatpush.bf16.msra.mxu0 %v942
    %1319 = vmatpush.bf16.msra.mxu0 %v940
    %1320 = vmatpush.bf16.msra.mxu0 %v938
    %1321 = vmatpush.bf16.msra.mxu0 %v936
    %1322 = vmatmul.bf16.gmra.mxu0 %v306
    %v1323 = vpop.f32.mrf.mxu0
    %v1324 = vadd.f32 %v1311, %v1323
    %v1325 = vpop.f32.mrf.mxu0
    %1326 = vdwg.mxu0
    %1327 = vmatpush.bf16.msra.mxu0 %v966
    %1328 = vmatpush.bf16.msra.mxu0 %v964
    %1329 = vmatpush.bf16.msra.mxu0 %v962
    %1330 = vmatpush.bf16.msra.mxu0 %v960
    %1331 = vmatpush.bf16.msra.mxu0 %v958
    %1332 = vmatpush.bf16.msra.mxu0 %v956
    %1333 = vmatpush.bf16.msra.mxu0 %v954
    %1334 = vmatpush.bf16.msra.mxu0 %v952
    %1335 = vmatmul.bf16.gmra.mxu0 %v307
    %v1336 = vpop.f32.mrf.mxu0
    %v1337 = vadd.f32 %v1324, %v1336
    %v1338 = vpop.f32.mrf.mxu0
    %1339 = vdwg.mxu0
    %1340 = vmatpush.bf16.msra.mxu0 %v982
    %1341 = vmatpush.bf16.msra.mxu0 %v980
    %1342 = vmatpush.bf16.msra.mxu0 %v978
    %1343 = vmatpush.bf16.msra.mxu0 %v976
    %1344 = vmatpush.bf16.msra.mxu0 %v974
    %1345 = vmatpush.bf16.msra.mxu0 %v972
    %1346 = vmatpush.bf16.msra.mxu0 %v970
    %1347 = vmatpush.bf16.msra.mxu0 %v968
    %1348 = vmatmul.bf16.gmra.mxu0 %v308
    %v1349 = vpop.f32.mrf.mxu0
    %v1350 = vadd.f32 %v1337, %v1349
    %v1351 = vpop.f32.mrf.mxu0
    %1352 = vdwg.mxu0
    %1353 = vmatpush.bf16.msra.mxu0 %v998
    %1354 = vmatpush.bf16.msra.mxu0 %v996
    %1355 = vmatpush.bf16.msra.mxu0 %v994
    %1356 = vmatpush.bf16.msra.mxu0 %v992
    %1357 = vmatpush.bf16.msra.mxu0 %v990
    %1358 = vmatpush.bf16.msra.mxu0 %v988
    %1359 = vmatpush.bf16.msra.mxu0 %v986
    %1360 = vmatpush.bf16.msra.mxu0 %v984
    %1361 = vmatmul.bf16.gmra.mxu0 %v309
    %v1362 = vpop.f32.mrf.mxu0
    %v1363 = vadd.f32 %v1350, %v1362
    %v1364 = vpop.f32.mrf.mxu0
    %1365 = vdwg.mxu0
    %1366 = vmatpush.bf16.msra.mxu0 %v1014
    %1367 = vmatpush.bf16.msra.mxu0 %v1012
    %1368 = vmatpush.bf16.msra.mxu0 %v1010
    %1369 = vmatpush.bf16.msra.mxu0 %v1008
    %1370 = vmatpush.bf16.msra.mxu0 %v1006
    %1371 = vmatpush.bf16.msra.mxu0 %v1004
    %1372 = vmatpush.bf16.msra.mxu0 %v1002
    %1373 = vmatpush.bf16.msra.mxu0 %v1000
    %1374 = vmatmul.bf16.gmra.mxu0 %v310
    %v1375 = vpop.f32.mrf.mxu0
    %v1376 = vadd.f32 %v1363, %v1375
    %v1377 = vpop.f32.mrf.mxu0
    %1378 = vdwg.mxu0
    %1379 = vmatpush.bf16.msra.mxu0 %v1030
    %1380 = vmatpush.bf16.msra.mxu0 %v1028
    %1381 = vmatpush.bf16.msra.mxu0 %v1026
    %1382 = vmatpush.bf16.msra.mxu0 %v1024
    %1383 = vmatpush.bf16.msra.mxu0 %v1022
    %1384 = vmatpush.bf16.msra.mxu0 %v1020
    %1385 = vmatpush.bf16.msra.mxu0 %v1018
    %1386 = vmatpush.bf16.msra.mxu0 %v1016
    %1387 = vmatmul.bf16.gmra.mxu0 %v311
    %v1388 = vpop.f32.mrf.mxu0
    %v1389 = vadd.f32 %v1376, %v1388
    %v1390 = vpop.f32.mrf.mxu0
    %1391 = vdwg.mxu0
    %1392 = vmatpush.bf16.msra.mxu0 %v1046
    %1393 = vmatpush.bf16.msra.mxu0 %v1044
    %1394 = vmatpush.bf16.msra.mxu0 %v1042
    %1395 = vmatpush.bf16.msra.mxu0 %v1040
    %1396 = vmatpush.bf16.msra.mxu0 %v1038
    %1397 = vmatpush.bf16.msra.mxu0 %v1036
    %1398 = vmatpush.bf16.msra.mxu0 %v1034
    %1399 = vmatpush.bf16.msra.mxu0 %v1032
    %1400 = vmatmul.bf16.gmra.mxu0 %v312
    %v1401 = vpop.f32.mrf.mxu0
    %v1402 = vadd.f32 %v1389, %v1401
    %v1403 = vpop.f32.mrf.mxu0
    %1404 = vdwg.mxu0
    %1405 = vmatpush.bf16.msra.mxu0 %v1062
    %1406 = vmatpush.bf16.msra.mxu0 %v1060
    %1407 = vmatpush.bf16.msra.mxu0 %v1058
    %1408 = vmatpush.bf16.msra.mxu0 %v1056
    %1409 = vmatpush.bf16.msra.mxu0 %v1054
    %1410 = vmatpush.bf16.msra.mxu0 %v1052
    %1411 = vmatpush.bf16.msra.mxu0 %v1050
    %1412 = vmatpush.bf16.msra.mxu0 %v1048
    %1413 = vmatmul.bf16.gmra.mxu0 %v313
    %v1414 = vpop.f32.mrf.mxu0
    %v1415 = vadd.f32 %v1402, %v1414
    %v1416 = vpop.f32.mrf.mxu0
    %1417 = vdwg.mxu0
    %1418 = vmatpush.bf16.msra.mxu0 %v1078
    %1419 = vmatpush.bf16.msra.mxu0 %v1076
    %1420 = vmatpush.bf16.msra.mxu0 %v1074
    %1421 = vmatpush.bf16.msra.mxu0 %v1072
    %1422 = vmatpush.bf16.msra.mxu0 %v1070
    %1423 = vmatpush.bf16.msra.mxu0 %v1068
    %1424 = vmatpush.bf16.msra.mxu0 %v1066
    %1425 = vmatpush.bf16.msra.mxu0 %v1064
    %1426 = vmatmul.bf16.gmra.mxu0 %v314
    %v1427 = vpop.f32.mrf.mxu0
    %v1428 = vadd.f32 %v1415, %v1427
    %v1429 = vpop.f32.mrf.mxu0
    %1430 = vdwg.mxu0
    %1431 = vmatpush.bf16.msra.mxu0 %v1094
    %1432 = vmatpush.bf16.msra.mxu0 %v1092
    %1433 = vmatpush.bf16.msra.mxu0 %v1090
    %1434 = vmatpush.bf16.msra.mxu0 %v1088
    %1435 = vmatpush.bf16.msra.mxu0 %v1086
    %1436 = vmatpush.bf16.msra.mxu0 %v1084
    %1437 = vmatpush.bf16.msra.mxu0 %v1082
    %1438 = vmatpush.bf16.msra.mxu0 %v1080
    %1439 = vmatmul.bf16.gmra.mxu0 %v315
    %v1440 = vpop.f32.mrf.mxu0
    %v1441 = vadd.f32 %v1428, %v1440
    %v1442 = vpop.f32.mrf.mxu0
    %1443 = vdwg.mxu0
    %1444 = vmatpush.bf16.msra.mxu0 %v919
    %1445 = vmatpush.bf16.msra.mxu0 %v917
    %1446 = vmatpush.bf16.msra.mxu0 %v915
    %1447 = vmatpush.bf16.msra.mxu0 %v913
    %1448 = vmatpush.bf16.msra.mxu0 %v911
    %1449 = vmatpush.bf16.msra.mxu0 %v909
    %1450 = vmatpush.bf16.msra.mxu0 %v907
    %1451 = vmatpush.bf16.msra.mxu0 %v905
    %1452 = vmatmul.bf16.gmra.mxu0 %v304
    %v1453 = vpop.f32.mrf.mxu0
    %v1454 = vadd.f32 0.0, %v1453
    %v1455 = vpop.f32.mrf.mxu0
    %1456 = vdwg.mxu0
    %1457 = vmatpush.bf16.msra.mxu0 %v935
    %1458 = vmatpush.bf16.msra.mxu0 %v933
    %1459 = vmatpush.bf16.msra.mxu0 %v931
    %1460 = vmatpush.bf16.msra.mxu0 %v929
    %1461 = vmatpush.bf16.msra.mxu0 %v927
    %1462 = vmatpush.bf16.msra.mxu0 %v925
    %1463 = vmatpush.bf16.msra.mxu0 %v923
    %1464 = vmatpush.bf16.msra.mxu0 %v921
    %1465 = vmatmul.bf16.gmra.mxu0 %v305
    %v1466 = vpop.f32.mrf.mxu0
    %v1467 = vadd.f32 %v1454, %v1466
    %v1468 = vpop.f32.mrf.mxu0
    %1469 = vdwg.mxu0
    %1470 = vmatpush.bf16.msra.mxu0 %v951
    %1471 = vmatpush.bf16.msra.mxu0 %v949
    %1472 = vmatpush.bf16.msra.mxu0 %v947
    %1473 = vmatpush.bf16.msra.mxu0 %v945
    %1474 = vmatpush.bf16.msra.mxu0 %v943
    %1475 = vmatpush.bf16.msra.mxu0 %v941
    %1476 = vmatpush.bf16.msra.mxu0 %v939
    %1477 = vmatpush.bf16.msra.mxu0 %v937
    %1478 = vmatmul.bf16.gmra.mxu0 %v306
    %v1479 = vpop.f32.mrf.mxu0
    %v1480 = vadd.f32 %v1467, %v1479
    %v1481 = vpop.f32.mrf.mxu0
    %1482 = vdwg.mxu0
    %1483 = vmatpush.bf16.msra.mxu0 %v967
    %1484 = vmatpush.bf16.msra.mxu0 %v965
    %1485 = vmatpush.bf16.msra.mxu0 %v963
    %1486 = vmatpush.bf16.msra.mxu0 %v961
    %1487 = vmatpush.bf16.msra.mxu0 %v959
    %1488 = vmatpush.bf16.msra.mxu0 %v957
    %1489 = vmatpush.bf16.msra.mxu0 %v955
    %1490 = vmatpush.bf16.msra.mxu0 %v953
    %1491 = vmatmul.bf16.gmra.mxu0 %v307
    %v1492 = vpop.f32.mrf.mxu0
    %v1493 = vadd.f32 %v1480, %v1492
    %v1494 = vpop.f32.mrf.mxu0
    %1495 = vdwg.mxu0
    %1496 = vmatpush.bf16.msra.mxu0 %v983
    %1497 = vmatpush.bf16.msra.mxu0 %v981
    %1498 = vmatpush.bf16.msra.mxu0 %v979
    %1499 = vmatpush.bf16.msra.mxu0 %v977
    %1500 = vmatpush.bf16.msra.mxu0 %v975
    %1501 = vmatpush.bf16.msra.mxu0 %v973
    %1502 = vmatpush.bf16.msra.mxu0 %v971
    %1503 = vmatpush.bf16.msra.mxu0 %v969
    %1504 = vmatmul.bf16.gmra.mxu0 %v308
    %v1505 = vpop.f32.mrf.mxu0
    %v1506 = vadd.f32 %v1493, %v1505
    %v1507 = vpop.f32.mrf.mxu0
    %1508 = vdwg.mxu0
    %1509 = vmatpush.bf16.msra.mxu0 %v999
    %1510 = vmatpush.bf16.msra.mxu0 %v997
    %1511 = vmatpush.bf16.msra.mxu0 %v995
    %1512 = vmatpush.bf16.msra.mxu0 %v993
    %1513 = vmatpush.bf16.msra.mxu0 %v991
    %1514 = vmatpush.bf16.msra.mxu0 %v989
    %1515 = vmatpush.bf16.msra.mxu0 %v987
    %1516 = vmatpush.bf16.msra.mxu0 %v985
    %1517 = vmatmul.bf16.gmra.mxu0 %v309
    %v1518 = vpop.f32.mrf.mxu0
    %v1519 = vadd.f32 %v1506, %v1518
    %v1520 = vpop.f32.mrf.mxu0
    %1521 = vdwg.mxu0
    %1522 = vmatpush.bf16.msra.mxu0 %v1015
    %1523 = vmatpush.bf16.msra.mxu0 %v1013
    %1524 = vmatpush.bf16.msra.mxu0 %v1011
    %1525 = vmatpush.bf16.msra.mxu0 %v1009
    %1526 = vmatpush.bf16.msra.mxu0 %v1007
    %1527 = vmatpush.bf16.msra.mxu0 %v1005
    %1528 = vmatpush.bf16.msra.mxu0 %v1003
    %1529 = vmatpush.bf16.msra.mxu0 %v1001
    %1530 = vmatmul.bf16.gmra.mxu0 %v310
    %v1531 = vpop.f32.mrf.mxu0
    %v1532 = vadd.f32 %v1519, %v1531
    %v1533 = vpop.f32.mrf.mxu0
    %1534 = vdwg.mxu0
    %1535 = vmatpush.bf16.msra.mxu0 %v1031
    %1536 = vmatpush.bf16.msra.mxu0 %v1029
    %1537 = vmatpush.bf16.msra.mxu0 %v1027
    %1538 = vmatpush.bf16.msra.mxu0 %v1025
    %1539 = vmatpush.bf16.msra.mxu0 %v1023
    %1540 = vmatpush.bf16.msra.mxu0 %v1021
    %1541 = vmatpush.bf16.msra.mxu0 %v1019
    %1542 = vmatpush.bf16.msra.mxu0 %v1017
    %1543 = vmatmul.bf16.gmra.mxu0 %v311
    %v1544 = vpop.f32.mrf.mxu0
    %v1545 = vadd.f32 %v1532, %v1544
    %v1546 = vpop.f32.mrf.mxu0
    %1547 = vdwg.mxu0
    %1548 = vmatpush.bf16.msra.mxu0 %v1047
    %1549 = vmatpush.bf16.msra.mxu0 %v1045
    %1550 = vmatpush.bf16.msra.mxu0 %v1043
    %1551 = vmatpush.bf16.msra.mxu0 %v1041
    %1552 = vmatpush.bf16.msra.mxu0 %v1039
    %1553 = vmatpush.bf16.msra.mxu0 %v1037
    %1554 = vmatpush.bf16.msra.mxu0 %v1035
    %1555 = vmatpush.bf16.msra.mxu0 %v1033
    %1556 = vmatmul.bf16.gmra.mxu0 %v312
    %v1557 = vpop.f32.mrf.mxu0
    %v1558 = vadd.f32 %v1545, %v1557
    %v1559 = vpop.f32.mrf.mxu0
    %1560 = vdwg.mxu0
    %1561 = vmatpush.bf16.msra.mxu0 %v1063
    %1562 = vmatpush.bf16.msra.mxu0 %v1061
    %1563 = vmatpush.bf16.msra.mxu0 %v1059
    %1564 = vmatpush.bf16.msra.mxu0 %v1057
    %1565 = vmatpush.bf16.msra.mxu0 %v1055
    %1566 = vmatpush.bf16.msra.mxu0 %v1053
    %1567 = vmatpush.bf16.msra.mxu0 %v1051
    %1568 = vmatpush.bf16.msra.mxu0 %v1049
    %1569 = vmatmul.bf16.gmra.mxu0 %v313
    %v1570 = vpop.f32.mrf.mxu0
    %v1571 = vadd.f32 %v1558, %v1570
    %v1572 = vpop.f32.mrf.mxu0
    %1573 = vdwg.mxu0
    %1574 = vmatpush.bf16.msra.mxu0 %v1079
    %1575 = vmatpush.bf16.msra.mxu0 %v1077
    %1576 = vmatpush.bf16.msra.mxu0 %v1075
    %1577 = vmatpush.bf16.msra.mxu0 %v1073
    %1578 = vmatpush.bf16.msra.mxu0 %v1071
    %1579 = vmatpush.bf16.msra.mxu0 %v1069
    %1580 = vmatpush.bf16.msra.mxu0 %v1067
    %1581 = vmatpush.bf16.msra.mxu0 %v1065
    %1582 = vmatmul.bf16.gmra.mxu0 %v314
    %v1583 = vpop.f32.mrf.mxu0
    %v1584 = vadd.f32 %v1571, %v1583
    %v1585 = vpop.f32.mrf.mxu0
    %1586 = vdwg.mxu0
    %1587 = vmatpush.bf16.msra.mxu0 %v1095
    %1588 = vmatpush.bf16.msra.mxu0 %v1093
    %1589 = vmatpush.bf16.msra.mxu0 %v1091
    %1590 = vmatpush.bf16.msra.mxu0 %v1089
    %1591 = vmatpush.bf16.msra.mxu0 %v1087
    %1592 = vmatpush.bf16.msra.mxu0 %v1085
    %1593 = vmatpush.bf16.msra.mxu0 %v1083
    %1594 = vmatpush.bf16.msra.mxu0 %v1081
    %1595 = vmatmul.bf16.gmra.mxu0 %v315
    %v1596 = vpop.f32.mrf.mxu0
    %v1597 = vadd.f32 %v1584, %v1596
    %v1598 = vpop.f32.mrf.mxu0
    %1599 = vdwg.mxu0
    %v1603 = vunpack.c.l.b16 %v88
    %v1604 = vunpack.c.h.b16 %v88
    %v1605 = vunpack.c.l.b16 %v89
    %v1606 = vunpack.c.h.b16 %v89
    %v1607 = vunpack.c.l.b16 %v90
    %v1608 = vunpack.c.h.b16 %v90
    %v1609 = vpack.c.b16 %v1603, %v1603
    %v1610 = vpack.c.b16 %v1604, %v1604
    %v1611 = vpack.c.b16 %v1605, %v1605
    %v1612 = vpack.c.b16 %v1606, %v1606
    %v1613 = vpack.c.b16 %v1607, %v1607
    %v1614 = vpack.c.b16 %v1608, %v1608
    %1621 = vmatpush.bf16.msra.mxu0 %v918
    %1622 = vmatpush.bf16.msra.mxu0 %v916
    %1623 = vmatpush.bf16.msra.mxu0 %v914
    %1624 = vmatpush.bf16.msra.mxu0 %v912
    %1625 = vmatpush.bf16.msra.mxu0 %v910
    %1626 = vmatpush.bf16.msra.mxu0 %v908
    %1627 = vmatpush.bf16.msra.mxu0 %v906
    %1628 = vmatpush.bf16.msra.mxu0 %v904
    %1629 = vmatmul.bf16.gmra.mxu0 %v310
    %v1630 = vpop.f32.mrf.mxu0
    %v1631 = vadd.f32 0.0, %v1630
    %v1632 = vpop.f32.mrf.mxu0
    %1633 = vdwg.mxu0
    %1634 = vmatpush.bf16.msra.mxu0 %v934
    %1635 = vmatpush.bf16.msra.mxu0 %v932
    %1636 = vmatpush.bf16.msra.mxu0 %v930
    %1637 = vmatpush.bf16.msra.mxu0 %v928
    %1638 = vmatpush.bf16.msra.mxu0 %v926
    %1639 = vmatpush.bf16.msra.mxu0 %v924
    %1640 = vmatpush.bf16.msra.mxu0 %v922
    %1641 = vmatpush.bf16.msra.mxu0 %v920
    %1642 = vmatmul.bf16.gmra.mxu0 %v311
    %v1643 = vpop.f32.mrf.mxu0
    %v1644 = vadd.f32 %v1631, %v1643
    %v1645 = vpop.f32.mrf.mxu0
    %1646 = vdwg.mxu0
    %1647 = vmatpush.bf16.msra.mxu0 %v950
    %1648 = vmatpush.bf16.msra.mxu0 %v948
    %1649 = vmatpush.bf16.msra.mxu0 %v946
    %1650 = vmatpush.bf16.msra.mxu0 %v944
    %1651 = vmatpush.bf16.msra.mxu0 %v942
    %1652 = vmatpush.bf16.msra.mxu0 %v940
    %1653 = vmatpush.bf16.msra.mxu0 %v938
    %1654 = vmatpush.bf16.msra.mxu0 %v936
    %1655 = vmatmul.bf16.gmra.mxu0 %v312
    %v1656 = vpop.f32.mrf.mxu0
    %v1657 = vadd.f32 %v1644, %v1656
    %v1658 = vpop.f32.mrf.mxu0
    %1659 = vdwg.mxu0
    %1660 = vmatpush.bf16.msra.mxu0 %v966
    %1661 = vmatpush.bf16.msra.mxu0 %v964
    %1662 = vmatpush.bf16.msra.mxu0 %v962
    %1663 = vmatpush.bf16.msra.mxu0 %v960
    %1664 = vmatpush.bf16.msra.mxu0 %v958
    %1665 = vmatpush.bf16.msra.mxu0 %v956
    %1666 = vmatpush.bf16.msra.mxu0 %v954
    %1667 = vmatpush.bf16.msra.mxu0 %v952
    %1668 = vmatmul.bf16.gmra.mxu0 %v313
    %v1669 = vpop.f32.mrf.mxu0
    %v1670 = vadd.f32 %v1657, %v1669
    %v1671 = vpop.f32.mrf.mxu0
    %1672 = vdwg.mxu0
    %1673 = vmatpush.bf16.msra.mxu0 %v982
    %1674 = vmatpush.bf16.msra.mxu0 %v980
    %1675 = vmatpush.bf16.msra.mxu0 %v978
    %1676 = vmatpush.bf16.msra.mxu0 %v976
    %1677 = vmatpush.bf16.msra.mxu0 %v974
    %1678 = vmatpush.bf16.msra.mxu0 %v972
    %1679 = vmatpush.bf16.msra.mxu0 %v970
    %1680 = vmatpush.bf16.msra.mxu0 %v968
    %1681 = vmatmul.bf16.gmra.mxu0 %v314
    %v1682 = vpop.f32.mrf.mxu0
    %v1683 = vadd.f32 %v1670, %v1682
    %v1684 = vpop.f32.mrf.mxu0
    %1685 = vdwg.mxu0
    %1686 = vmatpush.bf16.msra.mxu0 %v998
    %1687 = vmatpush.bf16.msra.mxu0 %v996
    %1688 = vmatpush.bf16.msra.mxu0 %v994
    %1689 = vmatpush.bf16.msra.mxu0 %v992
    %1690 = vmatpush.bf16.msra.mxu0 %v990
    %1691 = vmatpush.bf16.msra.mxu0 %v988
    %1692 = vmatpush.bf16.msra.mxu0 %v986
    %1693 = vmatpush.bf16.msra.mxu0 %v984
    %1694 = vmatmul.bf16.gmra.mxu0 %v315
    %v1695 = vpop.f32.mrf.mxu0
    %v1696 = vadd.f32 %v1683, %v1695
    %v1697 = vpop.f32.mrf.mxu0
    %1698 = vdwg.mxu0
    %1699 = vmatpush.bf16.msra.mxu0 %v1014
    %1700 = vmatpush.bf16.msra.mxu0 %v1012
    %1701 = vmatpush.bf16.msra.mxu0 %v1010
    %1702 = vmatpush.bf16.msra.mxu0 %v1008
    %1703 = vmatpush.bf16.msra.mxu0 %v1006
    %1704 = vmatpush.bf16.msra.mxu0 %v1004
    %1705 = vmatpush.bf16.msra.mxu0 %v1002
    %1706 = vmatpush.bf16.msra.mxu0 %v1000
    %1707 = vmatmul.bf16.gmra.mxu0 %v1609
    %v1708 = vpop.f32.mrf.mxu0
    %v1709 = vadd.f32 %v1696, %v1708
    %v1710 = vpop.f32.mrf.mxu0
    %1711 = vdwg.mxu0
    %1712 = vmatpush.bf16.msra.mxu0 %v1030
    %1713 = vmatpush.bf16.msra.mxu0 %v1028
    %1714 = vmatpush.bf16.msra.mxu0 %v1026
    %1715 = vmatpush.bf16.msra.mxu0 %v1024
    %1716 = vmatpush.bf16.msra.mxu0 %v1022
    %1717 = vmatpush.bf16.msra.mxu0 %v1020
    %1718 = vmatpush.bf16.msra.mxu0 %v1018
    %1719 = vmatpush.bf16.msra.mxu0 %v1016
    %1720 = vmatmul.bf16.gmra.mxu0 %v1610
    %v1721 = vpop.f32.mrf.mxu0
    %v1722 = vadd.f32 %v1709, %v1721
    %v1723 = vpop.f32.mrf.mxu0
    %1724 = vdwg.mxu0
    %1725 = vmatpush.bf16.msra.mxu0 %v1046
    %1726 = vmatpush.bf16.msra.mxu0 %v1044
    %1727 = vmatpush.bf16.msra.mxu0 %v1042
    %1728 = vmatpush.bf16.msra.mxu0 %v1040
    %1729 = vmatpush.bf16.msra.mxu0 %v1038
    %1730 = vmatpush.bf16.msra.mxu0 %v1036
    %1731 = vmatpush.bf16.msra.mxu0 %v1034
    %1732 = vmatpush.bf16.msra.mxu0 %v1032
    %1733 = vmatmul.bf16.gmra.mxu0 %v1611
    %v1734 = vpop.f32.mrf.mxu0
    %v1735 = vadd.f32 %v1722, %v1734
    %v1736 = vpop.f32.mrf.mxu0
    %1737 = vdwg.mxu0
    %1738 = vmatpush.bf16.msra.mxu0 %v1062
    %1739 = vmatpush.bf16.msra.mxu0 %v1060
    %1740 = vmatpush.bf16.msra.mxu0 %v1058
    %1741 = vmatpush.bf16.msra.mxu0 %v1056
    %1742 = vmatpush.bf16.msra.mxu0 %v1054
    %1743 = vmatpush.bf16.msra.mxu0 %v1052
    %1744 = vmatpush.bf16.msra.mxu0 %v1050
    %1745 = vmatpush.bf16.msra.mxu0 %v1048
    %1746 = vmatmul.bf16.gmra.mxu0 %v1612
    %v1747 = vpop.f32.mrf.mxu0
    %v1748 = vadd.f32 %v1735, %v1747
    %v1749 = vpop.f32.mrf.mxu0
    %1750 = vdwg.mxu0
    %1751 = vmatpush.bf16.msra.mxu0 %v1078
    %1752 = vmatpush.bf16.msra.mxu0 %v1076
    %1753 = vmatpush.bf16.msra.mxu0 %v1074
    %1754 = vmatpush.bf16.msra.mxu0 %v1072
    %1755 = vmatpush.bf16.msra.mxu0 %v1070
    %1756 = vmatpush.bf16.msra.mxu0 %v1068
    %1757 = vmatpush.bf16.msra.mxu0 %v1066
    %1758 = vmatpush.bf16.msra.mxu0 %v1064
    %1759 = vmatmul.bf16.gmra.mxu0 %v1613
    %v1760 = vpop.f32.mrf.mxu0
    %v1761 = vadd.f32 %v1748, %v1760
    %v1762 = vpop.f32.mrf.mxu0
    %1763 = vdwg.mxu0
    %1764 = vmatpush.bf16.msra.mxu0 %v1094
    %1765 = vmatpush.bf16.msra.mxu0 %v1092
    %1766 = vmatpush.bf16.msra.mxu0 %v1090
    %1767 = vmatpush.bf16.msra.mxu0 %v1088
    %1768 = vmatpush.bf16.msra.mxu0 %v1086
    %1769 = vmatpush.bf16.msra.mxu0 %v1084
    %1770 = vmatpush.bf16.msra.mxu0 %v1082
    %1771 = vmatpush.bf16.msra.mxu0 %v1080
    %1772 = vmatmul.bf16.gmra.mxu0 %v1614
    %v1773 = vpop.f32.mrf.mxu0
    %v1774 = vadd.f32 %v1761, %v1773
    %v1775 = vpop.f32.mrf.mxu0
    %1776 = vdwg.mxu0
    %1777 = vmatpush.bf16.msra.mxu0 %v919
    %1778 = vmatpush.bf16.msra.mxu0 %v917
    %1779 = vmatpush.bf16.msra.mxu0 %v915
    %1780 = vmatpush.bf16.msra.mxu0 %v913
    %1781 = vmatpush.bf16.msra.mxu0 %v911
    %1782 = vmatpush.bf16.msra.mxu0 %v909
    %1783 = vmatpush.bf16.msra.mxu0 %v907
    %1784 = vmatpush.bf16.msra.mxu0 %v905
    %1785 = vmatmul.bf16.gmra.mxu0 %v310
    %v1786 = vpop.f32.mrf.mxu0
    %v1787 = vadd.f32 0.0, %v1786
    %v1788 = vpop.f32.mrf.mxu0
    %1789 = vdwg.mxu0
    %1790 = vmatpush.bf16.msra.mxu0 %v935
    %1791 = vmatpush.bf16.msra.mxu0 %v933
    %1792 = vmatpush.bf16.msra.mxu0 %v931
    %1793 = vmatpush.bf16.msra.mxu0 %v929
    %1794 = vmatpush.bf16.msra.mxu0 %v927
    %1795 = vmatpush.bf16.msra.mxu0 %v925
    %1796 = vmatpush.bf16.msra.mxu0 %v923
    %1797 = vmatpush.bf16.msra.mxu0 %v921
    %1798 = vmatmul.bf16.gmra.mxu0 %v311
    %v1799 = vpop.f32.mrf.mxu0
    %v1800 = vadd.f32 %v1787, %v1799
    %v1801 = vpop.f32.mrf.mxu0
    %1802 = vdwg.mxu0
    %1803 = vmatpush.bf16.msra.mxu0 %v951
    %1804 = vmatpush.bf16.msra.mxu0 %v949
    %1805 = vmatpush.bf16.msra.mxu0 %v947
    %1806 = vmatpush.bf16.msra.mxu0 %v945
    %1807 = vmatpush.bf16.msra.mxu0 %v943
    %1808 = vmatpush.bf16.msra.mxu0 %v941
    %1809 = vmatpush.bf16.msra.mxu0 %v939
    %1810 = vmatpush.bf16.msra.mxu0 %v937
    %1811 = vmatmul.bf16.gmra.mxu0 %v312
    %v1812 = vpop.f32.mrf.mxu0
    %v1813 = vadd.f32 %v1800, %v1812
    %v1814 = vpop.f32.mrf.mxu0
    %1815 = vdwg.mxu0
    %1816 = vmatpush.bf16.msra.mxu0 %v967
    %1817 = vmatpush.bf16.msra.mxu0 %v965
    %1818 = vmatpush.bf16.msra.mxu0 %v963
    %1819 = vmatpush.bf16.msra.mxu0 %v961
    %1820 = vmatpush.bf16.msra.mxu0 %v959
    %1821 = vmatpush.bf16.msra.mxu0 %v957
    %1822 = vmatpush.bf16.msra.mxu0 %v955
    %1823 = vmatpush.bf16.msra.mxu0 %v953
    %1824 = vmatmul.bf16.gmra.mxu0 %v313
    %v1825 = vpop.f32.mrf.mxu0
    %v1826 = vadd.f32 %v1813, %v1825
    %v1827 = vpop.f32.mrf.mxu0
    %1828 = vdwg.mxu0
    %1829 = vmatpush.bf16.msra.mxu0 %v983
    %1830 = vmatpush.bf16.msra.mxu0 %v981
    %1831 = vmatpush.bf16.msra.mxu0 %v979
    %1832 = vmatpush.bf16.msra.mxu0 %v977
    %1833 = vmatpush.bf16.msra.mxu0 %v975
    %1834 = vmatpush.bf16.msra.mxu0 %v973
    %1835 = vmatpush.bf16.msra.mxu0 %v971
    %1836 = vmatpush.bf16.msra.mxu0 %v969
    %1837 = vmatmul.bf16.gmra.mxu0 %v314
    %v1838 = vpop.f32.mrf.mxu0
    %v1839 = vadd.f32 %v1826, %v1838
    %v1840 = vpop.f32.mrf.mxu0
    %1841 = vdwg.mxu0
    %1842 = vmatpush.bf16.msra.mxu0 %v999
    %1843 = vmatpush.bf16.msra.mxu0 %v997
    %1844 = vmatpush.bf16.msra.mxu0 %v995
    %1845 = vmatpush.bf16.msra.mxu0 %v993
    %1846 = vmatpush.bf16.msra.mxu0 %v991
    %1847 = vmatpush.bf16.msra.mxu0 %v989
    %1848 = vmatpush.bf16.msra.mxu0 %v987
    %1849 = vmatpush.bf16.msra.mxu0 %v985
    %1850 = vmatmul.bf16.gmra.mxu0 %v315
    %v1851 = vpop.f32.mrf.mxu0
    %v1852 = vadd.f32 %v1839, %v1851
    %v1853 = vpop.f32.mrf.mxu0
    %1854 = vdwg.mxu0
    %1855 = vmatpush.bf16.msra.mxu0 %v1015
    %1856 = vmatpush.bf16.msra.mxu0 %v1013
    %1857 = vmatpush.bf16.msra.mxu0 %v1011
    %1858 = vmatpush.bf16.msra.mxu0 %v1009
    %1859 = vmatpush.bf16.msra.mxu0 %v1007
    %1860 = vmatpush.bf16.msra.mxu0 %v1005
    %1861 = vmatpush.bf16.msra.mxu0 %v1003
    %1862 = vmatpush.bf16.msra.mxu0 %v1001
    %1863 = vmatmul.bf16.gmra.mxu0 %v1609
    %v1864 = vpop.f32.mrf.mxu0
    %v1865 = vadd.f32 %v1852, %v1864
    %v1866 = vpop.f32.mrf.mxu0
    %1867 = vdwg.mxu0
    %1868 = vmatpush.bf16.msra.mxu0 %v1031
    %1869 = vmatpush.bf16.msra.mxu0 %v1029
    %1870 = vmatpush.bf16.msra.mxu0 %v1027
    %1871 = vmatpush.bf16.msra.mxu0 %v1025
    %1872 = vmatpush.bf16.msra.mxu0 %v1023
    %1873 = vmatpush.bf16.msra.mxu0 %v1021
    %1874 = vmatpush.bf16.msra.mxu0 %v1019
    %1875 = vmatpush.bf16.msra.mxu0 %v1017
    %1876 = vmatmul.bf16.gmra.mxu0 %v1610
    %v1877 = vpop.f32.mrf.mxu0
    %v1878 = vadd.f32 %v1865, %v1877
    %v1879 = vpop.f32.mrf.mxu0
    %1880 = vdwg.mxu0
    %1881 = vmatpush.bf16.msra.mxu0 %v1047
    %1882 = vmatpush.bf16.msra.mxu0 %v1045
    %1883 = vmatpush.bf16.msra.mxu0 %v1043
    %1884 = vmatpush.bf16.msra.mxu0 %v1041
    %1885 = vmatpush.bf16.msra.mxu0 %v1039
    %1886 = vmatpush.bf16.msra.mxu0 %v1037
    %1887 = vmatpush.bf16.msra.mxu0 %v1035
    %1888 = vmatpush.bf16.msra.mxu0 %v1033
    %1889 = vmatmul.bf16.gmra.mxu0 %v1611
    %v1890 = vpop.f32.mrf.mxu0
    %v1891 = vadd.f32 %v1878, %v1890
    %v1892 = vpop.f32.mrf.mxu0
    %1893 = vdwg.mxu0
    %1894 = vmatpush.bf16.msra.mxu0 %v1063
    %1895 = vmatpush.bf16.msra.mxu0 %v1061
    %1896 = vmatpush.bf16.msra.mxu0 %v1059
    %1897 = vmatpush.bf16.msra.mxu0 %v1057
    %1898 = vmatpush.bf16.msra.mxu0 %v1055
    %1899 = vmatpush.bf16.msra.mxu0 %v1053
    %1900 = vmatpush.bf16.msra.mxu0 %v1051
    %1901 = vmatpush.bf16.msra.mxu0 %v1049
    %1902 = vmatmul.bf16.gmra.mxu0 %v1612
    %v1903 = vpop.f32.mrf.mxu0
    %v1904 = vadd.f32 %v1891, %v1903
    %v1905 = vpop.f32.mrf.mxu0
    %1906 = vdwg.mxu0
    %1907 = vmatpush.bf16.msra.mxu0 %v1079
    %1908 = vmatpush.bf16.msra.mxu0 %v1077
    %1909 = vmatpush.bf16.msra.mxu0 %v1075
    %1910 = vmatpush.bf16.msra.mxu0 %v1073
    %1911 = vmatpush.bf16.msra.mxu0 %v1071
    %1912 = vmatpush.bf16.msra.mxu0 %v1069
    %1913 = vmatpush.bf16.msra.mxu0 %v1067
    %1914 = vmatpush.bf16.msra.mxu0 %v1065
    %1915 = vmatmul.bf16.gmra.mxu0 %v1613
    %v1916 = vpop.f32.mrf.mxu0
    %v1917 = vadd.f32 %v1904, %v1916
    %v1918 = vpop.f32.mrf.mxu0
    %1919 = vdwg.mxu0
    %1920 = vmatpush.bf16.msra.mxu0 %v1095
    %1921 = vmatpush.bf16.msra.mxu0 %v1093
    %1922 = vmatpush.bf16.msra.mxu0 %v1091
    %1923 = vmatpush.bf16.msra.mxu0 %v1089
    %1924 = vmatpush.bf16.msra.mxu0 %v1087
    %1925 = vmatpush.bf16.msra.mxu0 %v1085
    %1926 = vmatpush.bf16.msra.mxu0 %v1083
    %1927 = vmatpush.bf16.msra.mxu0 %v1081
    %1928 = vmatmul.bf16.gmra.mxu0 %v1614
    %v1929 = vpop.f32.mrf.mxu0
    %v1930 = vadd.f32 %v1917, %v1929
    %v1931 = vpop.f32.mrf.mxu0
    %1932 = vdwg.mxu0
    %v1936 = vunpack.c.l.b16 %v91
    %v1937 = vunpack.c.h.b16 %v91
    %v1938 = vunpack.c.l.b16 %v92
    %v1939 = vunpack.c.h.b16 %v92
    %v1940 = vunpack.c.l.b16 %v93
    %v1941 = vunpack.c.h.b16 %v93
    %v1942 = vpack.c.b16 %v1936, %v1936
    %v1943 = vpack.c.b16 %v1937, %v1937
    %v1944 = vpack.c.b16 %v1938, %v1938
    %v1945 = vpack.c.b16 %v1939, %v1939
    %v1946 = vpack.c.b16 %v1940, %v1940
    %v1947 = vpack.c.b16 %v1941, %v1941
    %1954 = vmatpush.bf16.msra.mxu0 %v918
    %1955 = vmatpush.bf16.msra.mxu0 %v916
    %1956 = vmatpush.bf16.msra.mxu0 %v914
    %1957 = vmatpush.bf16.msra.mxu0 %v912
    %1958 = vmatpush.bf16.msra.mxu0 %v910
    %1959 = vmatpush.bf16.msra.mxu0 %v908
    %1960 = vmatpush.bf16.msra.mxu0 %v906
    %1961 = vmatpush.bf16.msra.mxu0 %v904
    %1962 = vmatmul.bf16.gmra.mxu0 %v1609
    %v1963 = vpop.f32.mrf.mxu0
    %v1964 = vadd.f32 0.0, %v1963
    %v1965 = vpop.f32.mrf.mxu0
    %1966 = vdwg.mxu0
    %1967 = vmatpush.bf16.msra.mxu0 %v934
    %1968 = vmatpush.bf16.msra.mxu0 %v932
    %1969 = vmatpush.bf16.msra.mxu0 %v930
    %1970 = vmatpush.bf16.msra.mxu0 %v928
    %1971 = vmatpush.bf16.msra.mxu0 %v926
    %1972 = vmatpush.bf16.msra.mxu0 %v924
    %1973 = vmatpush.bf16.msra.mxu0 %v922
    %1974 = vmatpush.bf16.msra.mxu0 %v920
    %1975 = vmatmul.bf16.gmra.mxu0 %v1610
    %v1976 = vpop.f32.mrf.mxu0
    %v1977 = vadd.f32 %v1964, %v1976
    %v1978 = vpop.f32.mrf.mxu0
    %1979 = vdwg.mxu0
    %1980 = vmatpush.bf16.msra.mxu0 %v950
    %1981 = vmatpush.bf16.msra.mxu0 %v948
    %1982 = vmatpush.bf16.msra.mxu0 %v946
    %1983 = vmatpush.bf16.msra.mxu0 %v944
    %1984 = vmatpush.bf16.msra.mxu0 %v942
    %1985 = vmatpush.bf16.msra.mxu0 %v940
    %1986 = vmatpush.bf16.msra.mxu0 %v938
    %1987 = vmatpush.bf16.msra.mxu0 %v936
    %1988 = vmatmul.bf16.gmra.mxu0 %v1611
    %v1989 = vpop.f32.mrf.mxu0
    %v1990 = vadd.f32 %v1977, %v1989
    %v1991 = vpop.f32.mrf.mxu0
    %1992 = vdwg.mxu0
    %1993 = vmatpush.bf16.msra.mxu0 %v966
    %1994 = vmatpush.bf16.msra.mxu0 %v964
    %1995 = vmatpush.bf16.msra.mxu0 %v962
    %1996 = vmatpush.bf16.msra.mxu0 %v960
    %1997 = vmatpush.bf16.msra.mxu0 %v958
    %1998 = vmatpush.bf16.msra.mxu0 %v956
    %1999 = vmatpush.bf16.msra.mxu0 %v954
    %2000 = vmatpush.bf16.msra.mxu0 %v952
    %2001 = vmatmul.bf16.gmra.mxu0 %v1612
    %v2002 = vpop.f32.mrf.mxu0
    %v2003 = vadd.f32 %v1990, %v2002
    %v2004 = vpop.f32.mrf.mxu0
    %2005 = vdwg.mxu0
    %2006 = vmatpush.bf16.msra.mxu0 %v982
    %2007 = vmatpush.bf16.msra.mxu0 %v980
    %2008 = vmatpush.bf16.msra.mxu0 %v978
    %2009 = vmatpush.bf16.msra.mxu0 %v976
    %2010 = vmatpush.bf16.msra.mxu0 %v974
    %2011 = vmatpush.bf16.msra.mxu0 %v972
    %2012 = vmatpush.bf16.msra.mxu0 %v970
    %2013 = vmatpush.bf16.msra.mxu0 %v968
    %2014 = vmatmul.bf16.gmra.mxu0 %v1613
    %v2015 = vpop.f32.mrf.mxu0
    %v2016 = vadd.f32 %v2003, %v2015
    %v2017 = vpop.f32.mrf.mxu0
    %2018 = vdwg.mxu0
    %2019 = vmatpush.bf16.msra.mxu0 %v998
    %2020 = vmatpush.bf16.msra.mxu0 %v996
    %2021 = vmatpush.bf16.msra.mxu0 %v994
    %2022 = vmatpush.bf16.msra.mxu0 %v992
    %2023 = vmatpush.bf16.msra.mxu0 %v990
    %2024 = vmatpush.bf16.msra.mxu0 %v988
    %2025 = vmatpush.bf16.msra.mxu0 %v986
    %2026 = vmatpush.bf16.msra.mxu0 %v984
    %2027 = vmatmul.bf16.gmra.mxu0 %v1614
    %v2028 = vpop.f32.mrf.mxu0
    %v2029 = vadd.f32 %v2016, %v2028
    %v2030 = vpop.f32.mrf.mxu0
    %2031 = vdwg.mxu0
    %2032 = vmatpush.bf16.msra.mxu0 %v1014
    %2033 = vmatpush.bf16.msra.mxu0 %v1012
    %2034 = vmatpush.bf16.msra.mxu0 %v1010
    %2035 = vmatpush.bf16.msra.mxu0 %v1008
    %2036 = vmatpush.bf16.msra.mxu0 %v1006
    %2037 = vmatpush.bf16.msra.mxu0 %v1004
    %2038 = vmatpush.bf16.msra.mxu0 %v1002
    %2039 = vmatpush.bf16.msra.mxu0 %v1000
    %2040 = vmatmul.bf16.gmra.mxu0 %v1942
    %v2041 = vpop.f32.mrf.mxu0
    %v2042 = vadd.f32 %v2029, %v2041
    %v2043 = vpop.f32.mrf.mxu0
    %2044 = vdwg.mxu0
    %2045 = vmatpush.bf16.msra.mxu0 %v1030
    %2046 = vmatpush.bf16.msra.mxu0 %v1028
    %2047 = vmatpush.bf16.msra.mxu0 %v1026
    %2048 = vmatpush.bf16.msra.mxu0 %v1024
    %2049 = vmatpush.bf16.msra.mxu0 %v1022
    %2050 = vmatpush.bf16.msra.mxu0 %v1020
    %2051 = vmatpush.bf16.msra.mxu0 %v1018
    %2052 = vmatpush.bf16.msra.mxu0 %v1016
    %2053 = vmatmul.bf16.gmra.mxu0 %v1943
    %v2054 = vpop.f32.mrf.mxu0
    %v2055 = vadd.f32 %v2042, %v2054
    %v2056 = vpop.f32.mrf.mxu0
    %2057 = vdwg.mxu0
    %2058 = vmatpush.bf16.msra.mxu0 %v1046
    %2059 = vmatpush.bf16.msra.mxu0 %v1044
    %2060 = vmatpush.bf16.msra.mxu0 %v1042
    %2061 = vmatpush.bf16.msra.mxu0 %v1040
    %2062 = vmatpush.bf16.msra.mxu0 %v1038
    %2063 = vmatpush.bf16.msra.mxu0 %v1036
    %2064 = vmatpush.bf16.msra.mxu0 %v1034
    %2065 = vmatpush.bf16.msra.mxu0 %v1032
    %2066 = vmatmul.bf16.gmra.mxu0 %v1944
    %v2067 = vpop.f32.mrf.mxu0
    %v2068 = vadd.f32 %v2055, %v2067
    %v2069 = vpop.f32.mrf.mxu0
    %2070 = vdwg.mxu0
    %2071 = vmatpush.bf16.msra.mxu0 %v1062
    %2072 = vmatpush.bf16.msra.mxu0 %v1060
    %2073 = vmatpush.bf16.msra.mxu0 %v1058
    %2074 = vmatpush.bf16.msra.mxu0 %v1056
    %2075 = vmatpush.bf16.msra.mxu0 %v1054
    %2076 = vmatpush.bf16.msra.mxu0 %v1052
    %2077 = vmatpush.bf16.msra.mxu0 %v1050
    %2078 = vmatpush.bf16.msra.mxu0 %v1048
    %2079 = vmatmul.bf16.gmra.mxu0 %v1945
    %v2080 = vpop.f32.mrf.mxu0
    %v2081 = vadd.f32 %v2068, %v2080
    %v2082 = vpop.f32.mrf.mxu0
    %2083 = vdwg.mxu0
    %2084 = vmatpush.bf16.msra.mxu0 %v1078
    %2085 = vmatpush.bf16.msra.mxu0 %v1076
    %2086 = vmatpush.bf16.msra.mxu0 %v1074
    %2087 = vmatpush.bf16.msra.mxu0 %v1072
    %2088 = vmatpush.bf16.msra.mxu0 %v1070
    %2089 = vmatpush.bf16.msra.mxu0 %v1068
    %2090 = vmatpush.bf16.msra.mxu0 %v1066
    %2091 = vmatpush.bf16.msra.mxu0 %v1064
    %2092 = vmatmul.bf16.gmra.mxu0 %v1946
    %v2093 = vpop.f32.mrf.mxu0
    %v2094 = vadd.f32 %v2081, %v2093
    %v2095 = vpop.f32.mrf.mxu0
    %2096 = vdwg.mxu0
    %2097 = vmatpush.bf16.msra.mxu0 %v1094
    %2098 = vmatpush.bf16.msra.mxu0 %v1092
    %2099 = vmatpush.bf16.msra.mxu0 %v1090
    %2100 = vmatpush.bf16.msra.mxu0 %v1088
    %2101 = vmatpush.bf16.msra.mxu0 %v1086
    %2102 = vmatpush.bf16.msra.mxu0 %v1084
    %2103 = vmatpush.bf16.msra.mxu0 %v1082
    %2104 = vmatpush.bf16.msra.mxu0 %v1080
    %2105 = vmatmul.bf16.gmra.mxu0 %v1947
    %v2106 = vpop.f32.mrf.mxu0
    %v2107 = vadd.f32 %v2094, %v2106
    %v2108 = vpop.f32.mrf.mxu0
    %2109 = vdwg.mxu0
    %2110 = vmatpush.bf16.msra.mxu0 %v919
    %2111 = vmatpush.bf16.msra.mxu0 %v917
    %2112 = vmatpush.bf16.msra.mxu0 %v915
    %2113 = vmatpush.bf16.msra.mxu0 %v913
    %2114 = vmatpush.bf16.msra.mxu0 %v911
    %2115 = vmatpush.bf16.msra.mxu0 %v909
    %2116 = vmatpush.bf16.msra.mxu0 %v907
    %2117 = vmatpush.bf16.msra.mxu0 %v905
    %2118 = vmatmul.bf16.gmra.mxu0 %v1609
    %v2119 = vpop.f32.mrf.mxu0
    %v2120 = vadd.f32 0.0, %v2119
    %v2121 = vpop.f32.mrf.mxu0
    %2122 = vdwg.mxu0
    %2123 = vmatpush.bf16.msra.mxu0 %v935
    %2124 = vmatpush.bf16.msra.mxu0 %v933
    %2125 = vmatpush.bf16.msra.mxu0 %v931
    %2126 = vmatpush.bf16.msra.mxu0 %v929
    %2127 = vmatpush.bf16.msra.mxu0 %v927
    %2128 = vmatpush.bf16.msra.mxu0 %v925
    %2129 = vmatpush.bf16.msra.mxu0 %v923
    %2130 = vmatpush.bf16.msra.mxu0 %v921
    %2131 = vmatmul.bf16.gmra.mxu0 %v1610
    %v2132 = vpop.f32.mrf.mxu0
    %v2133 = vadd.f32 %v2120, %v2132
    %v2134 = vpop.f32.mrf.mxu0
    %2135 = vdwg.mxu0
    %2136 = vmatpush.bf16.msra.mxu0 %v951
    %2137 = vmatpush.bf16.msra.mxu0 %v949
    %2138 = vmatpush.bf16.msra.mxu0 %v947
    %2139 = vmatpush.bf16.msra.mxu0 %v945
    %2140 = vmatpush.bf16.msra.mxu0 %v943
    %2141 = vmatpush.bf16.msra.mxu0 %v941
    %2142 = vmatpush.bf16.msra.mxu0 %v939
    %2143 = vmatpush.bf16.msra.mxu0 %v937
    %2144 = vmatmul.bf16.gmra.mxu0 %v1611
    %v2145 = vpop.f32.mrf.mxu0
    %v2146 = vadd.f32 %v2133, %v2145
    %v2147 = vpop.f32.mrf.mxu0
    %2148 = vdwg.mxu0
    %2149 = vmatpush.bf16.msra.mxu0 %v967
    %2150 = vmatpush.bf16.msra.mxu0 %v965
    %2151 = vmatpush.bf16.msra.mxu0 %v963
    %2152 = vmatpush.bf16.msra.mxu0 %v961
    %2153 = vmatpush.bf16.msra.mxu0 %v959
    %2154 = vmatpush.bf16.msra.mxu0 %v957
    %2155 = vmatpush.bf16.msra.mxu0 %v955
    %2156 = vmatpush.bf16.msra.mxu0 %v953
    %2157 = vmatmul.bf16.gmra.mxu0 %v1612
    %v2158 = vpop.f32.mrf.mxu0
    %v2159 = vadd.f32 %v2146, %v2158
    %v2160 = vpop.f32.mrf.mxu0
    %2161 = vdwg.mxu0
    %2162 = vmatpush.bf16.msra.mxu0 %v983
    %2163 = vmatpush.bf16.msra.mxu0 %v981
    %2164 = vmatpush.bf16.msra.mxu0 %v979
    %2165 = vmatpush.bf16.msra.mxu0 %v977
    %2166 = vmatpush.bf16.msra.mxu0 %v975
    %2167 = vmatpush.bf16.msra.mxu0 %v973
    %2168 = vmatpush.bf16.msra.mxu0 %v971
    %2169 = vmatpush.bf16.msra.mxu0 %v969
    %2170 = vmatmul.bf16.gmra.mxu0 %v1613
    %v2171 = vpop.f32.mrf.mxu0
    %v2172 = vadd.f32 %v2159, %v2171
    %v2173 = vpop.f32.mrf.mxu0
    %2174 = vdwg.mxu0
    %2175 = vmatpush.bf16.msra.mxu0 %v999
    %2176 = vmatpush.bf16.msra.mxu0 %v997
    %2177 = vmatpush.bf16.msra.mxu0 %v995
    %2178 = vmatpush.bf16.msra.mxu0 %v993
    %2179 = vmatpush.bf16.msra.mxu0 %v991
    %2180 = vmatpush.bf16.msra.mxu0 %v989
    %2181 = vmatpush.bf16.msra.mxu0 %v987
    %2182 = vmatpush.bf16.msra.mxu0 %v985
    %2183 = vmatmul.bf16.gmra.mxu0 %v1614
    %v2184 = vpop.f32.mrf.mxu0
    %v2185 = vadd.f32 %v2172, %v2184
    %v2186 = vpop.f32.mrf.mxu0
    %2187 = vdwg.mxu0
    %2188 = vmatpush.bf16.msra.mxu0 %v1015
    %2189 = vmatpush.bf16.msra.mxu0 %v1013
    %2190 = vmatpush.bf16.msra.mxu0 %v1011
    %2191 = vmatpush.bf16.msra.mxu0 %v1009
    %2192 = vmatpush.bf16.msra.mxu0 %v1007
    %2193 = vmatpush.bf16.msra.mxu0 %v1005
    %2194 = vmatpush.bf16.msra.mxu0 %v1003
    %2195 = vmatpush.bf16.msra.mxu0 %v1001
    %2196 = vmatmul.bf16.gmra.mxu0 %v1942
    %v2197 = vpop.f32.mrf.mxu0
    %v2198 = vadd.f32 %v2185, %v2197
    %v2199 = vpop.f32.mrf.mxu0
    %2200 = vdwg.mxu0
    %2201 = vmatpush.bf16.msra.mxu0 %v1031
    %2202 = vmatpush.bf16.msra.mxu0 %v1029
    %2203 = vmatpush.bf16.msra.mxu0 %v1027
    %2204 = vmatpush.bf16.msra.mxu0 %v1025
    %2205 = vmatpush.bf16.msra.mxu0 %v1023
    %2206 = vmatpush.bf16.msra.mxu0 %v1021
    %2207 = vmatpush.bf16.msra.mxu0 %v1019
    %2208 = vmatpush.bf16.msra.mxu0 %v1017
    %2209 = vmatmul.bf16.gmra.mxu0 %v1943
    %v2210 = vpop.f32.mrf.mxu0
    %v2211 = vadd.f32 %v2198, %v2210
    %v2212 = vpop.f32.mrf.mxu0
    %2213 = vdwg.mxu0
    %2214 = vmatpush.bf16.msra.mxu0 %v1047
    %2215 = vmatpush.bf16.msra.mxu0 %v1045
    %2216 = vmatpush.bf16.msra.mxu0 %v1043
    %2217 = vmatpush.bf16.msra.mxu0 %v1041
    %2218 = vmatpush.bf16.msra.mxu0 %v1039
    %2219 = vmatpush.bf16.msra.mxu0 %v1037
    %2220 = vmatpush.bf16.msra.mxu0 %v1035
    %2221 = vmatpush.bf16.msra.mxu0 %v1033
    %2222 = vmatmul.bf16.gmra.mxu0 %v1944
    %v2223 = vpop.f32.mrf.mxu0
    %v2224 = vadd.f32 %v2211, %v2223
    %v2225 = vpop.f32.mrf.mxu0
    %2226 = vdwg.mxu0
    %2227 = vmatpush.bf16.msra.mxu0 %v1063
    %2228 = vmatpush.bf16.msra.mxu0 %v1061
    %2229 = vmatpush.bf16.msra.mxu0 %v1059
    %2230 = vmatpush.bf16.msra.mxu0 %v1057
    %2231 = vmatpush.bf16.msra.mxu0 %v1055
    %2232 = vmatpush.bf16.msra.mxu0 %v1053
    %2233 = vmatpush.bf16.msra.mxu0 %v1051
    %2234 = vmatpush.bf16.msra.mxu0 %v1049
    %2235 = vmatmul.bf16.gmra.mxu0 %v1945
    %v2236 = vpop.f32.mrf.mxu0
    %v2237 = vadd.f32 %v2224, %v2236
    %v2238 = vpop.f32.mrf.mxu0
    %2239 = vdwg.mxu0
    %2240 = vmatpush.bf16.msra.mxu0 %v1079
    %2241 = vmatpush.bf16.msra.mxu0 %v1077
    %2242 = vmatpush.bf16.msra.mxu0 %v1075
    %2243 = vmatpush.bf16.msra.mxu0 %v1073
    %2244 = vmatpush.bf16.msra.mxu0 %v1071
    %2245 = vmatpush.bf16.msra.mxu0 %v1069
    %2246 = vmatpush.bf16.msra.mxu0 %v1067
    %2247 = vmatpush.bf16.msra.mxu0 %v1065
    %2248 = vmatmul.bf16.gmra.mxu0 %v1946
    %v2249 = vpop.f32.mrf.mxu0
    %v2250 = vadd.f32 %v2237, %v2249
    %v2251 = vpop.f32.mrf.mxu0
    %2252 = vdwg.mxu0
    %2253 = vmatpush.bf16.msra.mxu0 %v1095
    %2254 = vmatpush.bf16.msra.mxu0 %v1093
    %2255 = vmatpush.bf16.msra.mxu0 %v1091
    %2256 = vmatpush.bf16.msra.mxu0 %v1089
    %2257 = vmatpush.bf16.msra.mxu0 %v1087
    %2258 = vmatpush.bf16.msra.mxu0 %v1085
    %2259 = vmatpush.bf16.msra.mxu0 %v1083
    %2260 = vmatpush.bf16.msra.mxu0 %v1081
    %2261 = vmatmul.bf16.gmra.mxu0 %v1947
    %v2262 = vpop.f32.mrf.mxu0
    %v2263 = vadd.f32 %v2250, %v2262
    %v2264 = vpop.f32.mrf.mxu0
    %2265 = vdwg.mxu0
    %v2266 = vld [vmem:[%s2] sm:$0x3f]
    %v2268 = vperm.slane %v2266, 0
    %v2269 = vperm.slane %v2266, 1
    %v2270 = vperm.slane %v2266, 2
    %v2271 = vperm.slane %v2266, 3
    %v2272 = vperm.slane %v2266, 4
    %v2273 = vperm.slane %v2266, 5
    %v2280 = vadd.f32 %v1441, %v2268
    %v2281 = vadd.f32 %v1597, %v2269
    %v2282 = vadd.f32 %v1774, %v2270
    %v2283 = vadd.f32 %v1930, %v2271
    %v2284 = vadd.f32 %v2107, %v2272
    %v2285 = vadd.f32 %v2263, %v2273
    %v2286 = vadd.f32 %v2280, %v2281
    %v2287 = vadd.f32 %v2286, %v2282
    %v2288 = vadd.f32 %v2287, %v2283
    %v2289 = vadd.f32 %v2288, %v2284
    %v2290 = vadd.f32 %v2289, %v2285
    %2291 = vadd.xlane.f32.xlu0 %v2290
    %v2292 = vpop.xlane.xlu0 %2291
    %v2293 = vmul.f32 %v2280, %v2280
    %v2294 = vmul.f32 %v2281, %v2281
    %v2295 = vmul.f32 %v2282, %v2282
    %v2296 = vmul.f32 %v2283, %v2283
    %v2297 = vmul.f32 %v2284, %v2284
    %v2298 = vmul.f32 %v2285, %v2285
    %v2299 = vadd.f32 %v2293, %v2294
    %v2300 = vadd.f32 %v2299, %v2295
    %v2301 = vadd.f32 %v2300, %v2296
    %v2302 = vadd.f32 %v2301, %v2297
    %v2303 = vadd.f32 %v2302, %v2298
    %2304 = vadd.xlane.f32.xlu0 %v2303
    %v2305 = vpop.xlane.xlu0 %2304
    %v2306 = vmul.f32 %v2292, 0.0013020834
    %v2307 = vmul.f32 %v2305, 0.0013020834
    %v2308 = vmul.f32 %v2306, %v2306
    %v2309 = vsub.f32 %v2307, %v2308
    %v2310 = vmax.f32 %v2309, 0.0
    %v2311 = vadd.f32 %v2310, 1e-05
    %v2312 = vrsqrt.pop %v2311
    %v2313 = vmul.f32 %v2312, %v2311
    %v2314 = vmul.f32 %v2313, %v2312
    %v2315 = vmul.f32 0.5, %v2314
    %v2316 = vsub.f32 1.5, %v2315
    %v2317 = vmul.f32 %v2312, %v2316
    %vm2318 = vweird.f32 %v2311
    %vm2319 = vweird.f32 %v2312
    %vm2320 = vmor %vm2318, %vm2319
    %v2321 = vsel %vm2320, %v2312, %v2317
    %v2322 = vsub.f32 %v2280, %v2306
    %v2323 = vsub.f32 %v2281, %v2306
    %v2324 = vsub.f32 %v2282, %v2306
    %v2325 = vsub.f32 %v2283, %v2306
    %v2326 = vsub.f32 %v2284, %v2306
    %v2327 = vsub.f32 %v2285, %v2306
    %v2328 = vmul.f32 %v2322, %v2321
    %v2329 = vmul.f32 %v2323, %v2321
    %v2330 = vmul.f32 %v2324, %v2321
    %v2331 = vmul.f32 %v2325, %v2321
    %v2332 = vmul.f32 %v2326, %v2321
    %v2333 = vmul.f32 %v2327, %v2321
    %v2334 = vld [vmem:[%s3] sm:$0x3f]
    %v2336 = vperm.slane %v2334, 0
    %v2337 = vperm.slane %v2334, 1
    %v2338 = vperm.slane %v2334, 2
    %v2339 = vperm.slane %v2334, 3
    %v2340 = vperm.slane %v2334, 4
    %v2341 = vperm.slane %v2334, 5
    %v2348 = vmul.f32 %v2328, %v2336
    %v2349 = vmul.f32 %v2329, %v2337
    %v2350 = vmul.f32 %v2330, %v2338
    %v2351 = vmul.f32 %v2331, %v2339
    %v2352 = vmul.f32 %v2332, %v2340
    %v2353 = vmul.f32 %v2333, %v2341
    %v2354 = vld [vmem:[%s4] sm:$0x3f]
    %v2356 = vperm.slane %v2354, 0
    %v2357 = vperm.slane %v2354, 1
    %v2358 = vperm.slane %v2354, 2
    %v2359 = vperm.slane %v2354, 3
    %v2360 = vperm.slane %v2354, 4
    %v2361 = vperm.slane %v2354, 5
    %v2368 = vadd.f32 %v2348, %v2356
    %v2369 = vadd.f32 %v2349, %v2357
    %v2370 = vadd.f32 %v2350, %v2358
    %v2371 = vadd.f32 %v2351, %v2359
    %v2372 = vadd.f32 %v2352, %v2360
    %v2373 = vadd.f32 %v2353, %v2361
    %v2374 = vmax.f32 %v2368, 0.0
    %v2375 = vmax.f32 %v2369, 0.0
    %v2376 = vmax.f32 %v2370, 0.0
    %v2377 = vmax.f32 %v2371, 0.0
    %v2378 = vmax.f32 %v2372, 0.0
    %v2379 = vmax.f32 %v2373, 0.0
    %v2380 = vpack.c.bf16 %v2374, %v2374
    %v2381 = vpack.c.bf16 %v2375, %v2375
    %v2382 = vpack.c.bf16 %v2376, %v2376
    %v2383 = vpack.c.bf16 %v2377, %v2377
    %v2384 = vpack.c.bf16 %v2378, %v2378
    %v2385 = vpack.c.bf16 %v2379, %v2379
    %v2386 = vld [vmem:[#allocation4] sm:$0xf]
    %v2387 = vld [vmem:[#allocation4 + $0x4] sm:$0xf]
    %v2388 = vld [vmem:[#allocation4 + $0x8] sm:$0xf]
    %v2389 = vld [vmem:[#allocation4 + $0xc] sm:$0xf]
    %v2390 = vld [vmem:[#allocation4 + $0x10] sm:$0xf]
    %v2391 = vld [vmem:[#allocation4 + $0x14] sm:$0xf]
    %v2392 = vld [vmem:[#allocation4 + $0x18] sm:$0xf]
    %v2393 = vld [vmem:[#allocation4 + $0x1c] sm:$0xf]
    %v2394 = vld [vmem:[#allocation4 + $0x20] sm:$0xf]
    %v2395 = vld [vmem:[#allocation4 + $0x24] sm:$0xf]
    %v2396 = vld [vmem:[#allocation4 + $0x28] sm:$0xf]
    %v2397 = vld [vmem:[#allocation4 + $0x2c] sm:$0xf]
    %v2398 = vld [vmem:[#allocation4 + $0x30] sm:$0xf]
    %v2399 = vld [vmem:[#allocation4 + $0x34] sm:$0xf]
    %v2400 = vld [vmem:[#allocation4 + $0x38] sm:$0xf]
    %v2401 = vld [vmem:[#allocation4 + $0x3c] sm:$0xf]
    %v2402 = vld [vmem:[#allocation4 + $0x40] sm:$0xf]
    %v2403 = vld [vmem:[#allocation4 + $0x44] sm:$0xf]
    %v2404 = vld [vmem:[#allocation4 + $0x48] sm:$0xf]
    %v2405 = vld [vmem:[#allocation4 + $0x4c] sm:$0xf]
    %v2406 = vld [vmem:[#allocation4 + $0x50] sm:$0xf]
    %v2407 = vld [vmem:[#allocation4 + $0x54] sm:$0xf]
    %v2408 = vld [vmem:[#allocation4 + $0x58] sm:$0xf]
    %v2409 = vld [vmem:[#allocation4 + $0x5c] sm:$0xf]
    %v2410 = vld [vmem:[#allocation4 + $0x60] sm:$0xf]
    %v2411 = vld [vmem:[#allocation4 + $0x64] sm:$0xf]
    %v2412 = vld [vmem:[#allocation4 + $0x68] sm:$0xf]
    %v2413 = vld [vmem:[#allocation4 + $0x6c] sm:$0xf]
    %v2414 = vld [vmem:[#allocation4 + $0x70] sm:$0xf]
    %v2415 = vld [vmem:[#allocation4 + $0x74] sm:$0xf]
    %v2416 = vld [vmem:[#allocation4 + $0x78] sm:$0xf]
    %v2417 = vld [vmem:[#allocation4 + $0x7c] sm:$0xf]
    %v2418 = vld [vmem:[#allocation4 + $0x80] sm:$0xf]
    %v2419 = vld [vmem:[#allocation4 + $0x84] sm:$0xf]
    %v2420 = vld [vmem:[#allocation4 + $0x88] sm:$0xf]
    %v2421 = vld [vmem:[#allocation4 + $0x8c] sm:$0xf]
    %v2422 = vld [vmem:[#allocation4 + $0x90] sm:$0xf]
    %v2423 = vld [vmem:[#allocation4 + $0x94] sm:$0xf]
    %v2424 = vld [vmem:[#allocation4 + $0x98] sm:$0xf]
    %v2425 = vld [vmem:[#allocation4 + $0x9c] sm:$0xf]
    %v2426 = vld [vmem:[#allocation4 + $0xa0] sm:$0xf]
    %v2427 = vld [vmem:[#allocation4 + $0xa4] sm:$0xf]
    %v2428 = vld [vmem:[#allocation4 + $0xa8] sm:$0xf]
    %v2429 = vld [vmem:[#allocation4 + $0xac] sm:$0xf]
    %v2430 = vld [vmem:[#allocation4 + $0xb0] sm:$0xf]
    %v2431 = vld [vmem:[#allocation4 + $0xb4] sm:$0xf]
    %v2432 = vld [vmem:[#allocation4 + $0xb8] sm:$0xf]
    %v2433 = vld [vmem:[#allocation4 + $0xbc] sm:$0xf]
    %v2434 = vld [vmem:[#allocation4 + $0xc0] sm:$0xf]
    %v2435 = vld [vmem:[#allocation4 + $0xc4] sm:$0xf]
    %v2436 = vld [vmem:[#allocation4 + $0xc8] sm:$0xf]
    %v2437 = vld [vmem:[#allocation4 + $0xcc] sm:$0xf]
    %v2438 = vld [vmem:[#allocation4 + $0xd0] sm:$0xf]
    %v2439 = vld [vmem:[#allocation4 + $0xd4] sm:$0xf]
    %v2440 = vld [vmem:[#allocation4 + $0xd8] sm:$0xf]
    %v2441 = vld [vmem:[#allocation4 + $0xdc] sm:$0xf]
    %v2442 = vld [vmem:[#allocation4 + $0xe0] sm:$0xf]
    %v2443 = vld [vmem:[#allocation4 + $0xe4] sm:$0xf]
    %v2444 = vld [vmem:[#allocation4 + $0xe8] sm:$0xf]
    %v2445 = vld [vmem:[#allocation4 + $0xec] sm:$0xf]
    %v2446 = vld [vmem:[#allocation4 + $0xf0] sm:$0xf]
    %v2447 = vld [vmem:[#allocation4 + $0xf4] sm:$0xf]
    %v2448 = vld [vmem:[#allocation4 + $0xf8] sm:$0xf]
    %v2449 = vld [vmem:[#allocation4 + $0xfc] sm:$0xf]
    %v2450 = vld [vmem:[#allocation4 + $0x100] sm:$0xf]
    %v2451 = vld [vmem:[#allocation4 + $0x104] sm:$0xf]
    %v2452 = vld [vmem:[#allocation4 + $0x108] sm:$0xf]
    %v2453 = vld [vmem:[#allocation4 + $0x10c] sm:$0xf]
    %v2454 = vld [vmem:[#allocation4 + $0x110] sm:$0xf]
    %v2455 = vld [vmem:[#allocation4 + $0x114] sm:$0xf]
    %v2456 = vld [vmem:[#allocation4 + $0x118] sm:$0xf]
    %v2457 = vld [vmem:[#allocation4 + $0x11c] sm:$0xf]
    %v2458 = vld [vmem:[#allocation4 + $0x120] sm:$0xf]
    %v2459 = vld [vmem:[#allocation4 + $0x124] sm:$0xf]
    %v2460 = vld [vmem:[#allocation4 + $0x128] sm:$0xf]
    %v2461 = vld [vmem:[#allocation4 + $0x12c] sm:$0xf]
    %v2462 = vld [vmem:[#allocation4 + $0x130] sm:$0xf]
    %v2463 = vld [vmem:[#allocation4 + $0x134] sm:$0xf]
    %v2464 = vld [vmem:[#allocation4 + $0x138] sm:$0xf]
    %v2465 = vld [vmem:[#allocation4 + $0x13c] sm:$0xf]
    %v2466 = vld [vmem:[#allocation4 + $0x140] sm:$0xf]
    %v2467 = vld [vmem:[#allocation4 + $0x144] sm:$0xf]
    %v2468 = vld [vmem:[#allocation4 + $0x148] sm:$0xf]
    %v2469 = vld [vmem:[#allocation4 + $0x14c] sm:$0xf]
    %v2470 = vld [vmem:[#allocation4 + $0x150] sm:$0xf]
    %v2471 = vld [vmem:[#allocation4 + $0x154] sm:$0xf]
    %v2472 = vld [vmem:[#allocation4 + $0x158] sm:$0xf]
    %v2473 = vld [vmem:[#allocation4 + $0x15c] sm:$0xf]
    %v2474 = vld [vmem:[#allocation4 + $0x160] sm:$0xf]
    %v2475 = vld [vmem:[#allocation4 + $0x164] sm:$0xf]
    %v2476 = vld [vmem:[#allocation4 + $0x168] sm:$0xf]
    %v2477 = vld [vmem:[#allocation4 + $0x16c] sm:$0xf]
    %v2478 = vld [vmem:[#allocation4 + $0x170] sm:$0xf]
    %v2479 = vld [vmem:[#allocation4 + $0x174] sm:$0xf]
    %v2480 = vld [vmem:[#allocation4 + $0x178] sm:$0xf]
    %v2481 = vld [vmem:[#allocation4 + $0x17c] sm:$0xf]
    %v2482 = vld [vmem:[%s6] sm:$0x1]
    %v2484 = vperm.slane %v2482, 0
    %v2582 = vunpack.c.l.b16 %v2386
    %v2583 = vunpack.c.l.b16 %v2387
    %v2584 = vunpack.c.l.b16 %v2388
    %v2585 = vunpack.c.l.b16 %v2389
    %v2586 = vunpack.c.l.b16 %v2390
    %v2587 = vunpack.c.l.b16 %v2391
    %v2588 = vunpack.c.l.b16 %v2392
    %v2589 = vunpack.c.l.b16 %v2393
    %v2590 = vunpack.c.l.b16 %v2394
    %v2591 = vunpack.c.l.b16 %v2395
    %v2592 = vunpack.c.l.b16 %v2396
    %v2593 = vunpack.c.l.b16 %v2397
    %v2594 = vunpack.c.l.b16 %v2398
    %v2595 = vunpack.c.l.b16 %v2399
    %v2596 = vunpack.c.l.b16 %v2400
    %v2597 = vunpack.c.l.b16 %v2401
    %v2598 = vunpack.c.l.b16 %v2402
    %v2599 = vunpack.c.l.b16 %v2403
    %v2600 = vunpack.c.l.b16 %v2404
    %v2601 = vunpack.c.l.b16 %v2405
    %v2602 = vunpack.c.l.b16 %v2406
    %v2603 = vunpack.c.l.b16 %v2407
    %v2604 = vunpack.c.l.b16 %v2408
    %v2605 = vunpack.c.l.b16 %v2409
    %v2606 = vunpack.c.l.b16 %v2410
    %v2607 = vunpack.c.l.b16 %v2411
    %v2608 = vunpack.c.l.b16 %v2412
    %v2609 = vunpack.c.l.b16 %v2413
    %v2610 = vunpack.c.l.b16 %v2414
    %v2611 = vunpack.c.l.b16 %v2415
    %v2612 = vunpack.c.l.b16 %v2416
    %v2613 = vunpack.c.l.b16 %v2417
    %v2614 = vunpack.c.l.b16 %v2418
    %v2615 = vunpack.c.l.b16 %v2419
    %v2616 = vunpack.c.l.b16 %v2420
    %v2617 = vunpack.c.l.b16 %v2421
    %v2618 = vunpack.c.l.b16 %v2422
    %v2619 = vunpack.c.l.b16 %v2423
    %v2620 = vunpack.c.l.b16 %v2424
    %v2621 = vunpack.c.l.b16 %v2425
    %v2622 = vunpack.c.l.b16 %v2426
    %v2623 = vunpack.c.l.b16 %v2427
    %v2624 = vunpack.c.l.b16 %v2428
    %v2625 = vunpack.c.l.b16 %v2429
    %v2626 = vunpack.c.l.b16 %v2430
    %v2627 = vunpack.c.l.b16 %v2431
    %v2628 = vunpack.c.l.b16 %v2432
    %v2629 = vunpack.c.l.b16 %v2433
    %v2630 = vunpack.c.l.b16 %v2434
    %v2631 = vunpack.c.l.b16 %v2435
    %v2632 = vunpack.c.l.b16 %v2436
    %v2633 = vunpack.c.l.b16 %v2437
    %v2634 = vunpack.c.l.b16 %v2438
    %v2635 = vunpack.c.l.b16 %v2439
    %v2636 = vunpack.c.l.b16 %v2440
    %v2637 = vunpack.c.l.b16 %v2441
    %v2638 = vunpack.c.l.b16 %v2442
    %v2639 = vunpack.c.l.b16 %v2443
    %v2640 = vunpack.c.l.b16 %v2444
    %v2641 = vunpack.c.l.b16 %v2445
    %v2642 = vunpack.c.l.b16 %v2446
    %v2643 = vunpack.c.l.b16 %v2447
    %v2644 = vunpack.c.l.b16 %v2448
    %v2645 = vunpack.c.l.b16 %v2449
    %v2646 = vunpack.c.l.b16 %v2450
    %v2647 = vunpack.c.l.b16 %v2451
    %v2648 = vunpack.c.l.b16 %v2452
    %v2649 = vunpack.c.l.b16 %v2453
    %v2650 = vunpack.c.l.b16 %v2454
    %v2651 = vunpack.c.l.b16 %v2455
    %v2652 = vunpack.c.l.b16 %v2456
    %v2653 = vunpack.c.l.b16 %v2457
    %v2654 = vunpack.c.l.b16 %v2458
    %v2655 = vunpack.c.l.b16 %v2459
    %v2656 = vunpack.c.l.b16 %v2460
    %v2657 = vunpack.c.l.b16 %v2461
    %v2658 = vunpack.c.l.b16 %v2462
    %v2659 = vunpack.c.l.b16 %v2463
    %v2660 = vunpack.c.l.b16 %v2464
    %v2661 = vunpack.c.l.b16 %v2465
    %v2662 = vunpack.c.l.b16 %v2466
    %v2663 = vunpack.c.l.b16 %v2467
    %v2664 = vunpack.c.l.b16 %v2468
    %v2665 = vunpack.c.l.b16 %v2469
    %v2666 = vunpack.c.l.b16 %v2470
    %v2667 = vunpack.c.l.b16 %v2471
    %v2668 = vunpack.c.l.b16 %v2472
    %v2669 = vunpack.c.l.b16 %v2473
    %v2670 = vunpack.c.l.b16 %v2474
    %v2671 = vunpack.c.l.b16 %v2475
    %v2672 = vunpack.c.l.b16 %v2476
    %v2673 = vunpack.c.l.b16 %v2477
    %v2674 = vunpack.c.l.b16 %v2478
    %v2675 = vunpack.c.l.b16 %v2479
    %v2676 = vunpack.c.l.b16 %v2480
    %v2677 = vunpack.c.l.b16 %v2481
    %v2678 = vpack.c.b16 %v2583, %v2582
    %v2679 = vpack.c.b16 %v2585, %v2584
    %v2680 = vpack.c.b16 %v2587, %v2586
    %v2681 = vpack.c.b16 %v2589, %v2588
    %v2682 = vpack.c.b16 %v2591, %v2590
    %v2683 = vpack.c.b16 %v2593, %v2592
    %v2684 = vpack.c.b16 %v2595, %v2594
    %v2685 = vpack.c.b16 %v2597, %v2596
    %v2686 = vpack.c.b16 %v2599, %v2598
    %v2687 = vpack.c.b16 %v2601, %v2600
    %v2688 = vpack.c.b16 %v2603, %v2602
    %v2689 = vpack.c.b16 %v2605, %v2604
    %v2690 = vpack.c.b16 %v2607, %v2606
    %v2691 = vpack.c.b16 %v2609, %v2608
    %v2692 = vpack.c.b16 %v2611, %v2610
    %v2693 = vpack.c.b16 %v2613, %v2612
    %v2694 = vpack.c.b16 %v2615, %v2614
    %v2695 = vpack.c.b16 %v2617, %v2616
    %v2696 = vpack.c.b16 %v2619, %v2618
    %v2697 = vpack.c.b16 %v2621, %v2620
    %v2698 = vpack.c.b16 %v2623, %v2622
    %v2699 = vpack.c.b16 %v2625, %v2624
    %v2700 = vpack.c.b16 %v2627, %v2626
    %v2701 = vpack.c.b16 %v2629, %v2628
    %v2702 = vpack.c.b16 %v2631, %v2630
    %v2703 = vpack.c.b16 %v2633, %v2632
    %v2704 = vpack.c.b16 %v2635, %v2634
    %v2705 = vpack.c.b16 %v2637, %v2636
    %v2706 = vpack.c.b16 %v2639, %v2638
    %v2707 = vpack.c.b16 %v2641, %v2640
    %v2708 = vpack.c.b16 %v2643, %v2642
    %v2709 = vpack.c.b16 %v2645, %v2644
    %v2710 = vpack.c.b16 %v2647, %v2646
    %v2711 = vpack.c.b16 %v2649, %v2648
    %v2712 = vpack.c.b16 %v2651, %v2650
    %v2713 = vpack.c.b16 %v2653, %v2652
    %v2714 = vpack.c.b16 %v2655, %v2654
    %v2715 = vpack.c.b16 %v2657, %v2656
    %v2716 = vpack.c.b16 %v2659, %v2658
    %v2717 = vpack.c.b16 %v2661, %v2660
    %v2718 = vpack.c.b16 %v2663, %v2662
    %v2719 = vpack.c.b16 %v2665, %v2664
    %v2720 = vpack.c.b16 %v2667, %v2666
    %v2721 = vpack.c.b16 %v2669, %v2668
    %v2722 = vpack.c.b16 %v2671, %v2670
    %v2723 = vpack.c.b16 %v2673, %v2672
    %v2724 = vpack.c.b16 %v2675, %v2674
    %v2725 = vpack.c.b16 %v2677, %v2676
    %2774 = vmatpush.bf16.msra.mxu0 %v2685
    %2775 = vmatpush.bf16.msra.mxu0 %v2684
    %2776 = vmatpush.bf16.msra.mxu0 %v2683
    %2777 = vmatpush.bf16.msra.mxu0 %v2682
    %2778 = vmatpush.bf16.msra.mxu0 %v2681
    %2779 = vmatpush.bf16.msra.mxu0 %v2680
    %2780 = vmatpush.bf16.msra.mxu0 %v2679
    %2781 = vmatpush.bf16.msra.mxu0 %v2678
    %2782 = vmatmul.bf16.gmra.mxu0 %v2380
    %v2783 = vpop.f32.mrf.mxu0
    %v2784 = vadd.f32 %v2484, %v2783
    %v2785 = vpop.f32.mrf.mxu0
    %2786 = vdwg.mxu0
    %2787 = vmatpush.bf16.msra.mxu0 %v2693
    %2788 = vmatpush.bf16.msra.mxu0 %v2692
    %2789 = vmatpush.bf16.msra.mxu0 %v2691
    %2790 = vmatpush.bf16.msra.mxu0 %v2690
    %2791 = vmatpush.bf16.msra.mxu0 %v2689
    %2792 = vmatpush.bf16.msra.mxu0 %v2688
    %2793 = vmatpush.bf16.msra.mxu0 %v2687
    %2794 = vmatpush.bf16.msra.mxu0 %v2686
    %2795 = vmatmul.bf16.gmra.mxu0 %v2381
    %v2796 = vpop.f32.mrf.mxu0
    %v2797 = vadd.f32 %v2784, %v2796
    %v2798 = vpop.f32.mrf.mxu0
    %2799 = vdwg.mxu0
    %2800 = vmatpush.bf16.msra.mxu0 %v2701
    %2801 = vmatpush.bf16.msra.mxu0 %v2700
    %2802 = vmatpush.bf16.msra.mxu0 %v2699
    %2803 = vmatpush.bf16.msra.mxu0 %v2698
    %2804 = vmatpush.bf16.msra.mxu0 %v2697
    %2805 = vmatpush.bf16.msra.mxu0 %v2696
    %2806 = vmatpush.bf16.msra.mxu0 %v2695
    %2807 = vmatpush.bf16.msra.mxu0 %v2694
    %2808 = vmatmul.bf16.gmra.mxu0 %v2382
    %v2809 = vpop.f32.mrf.mxu0
    %v2810 = vadd.f32 %v2797, %v2809
    %v2811 = vpop.f32.mrf.mxu0
    %2812 = vdwg.mxu0
    %2813 = vmatpush.bf16.msra.mxu0 %v2709
    %2814 = vmatpush.bf16.msra.mxu0 %v2708
    %2815 = vmatpush.bf16.msra.mxu0 %v2707
    %2816 = vmatpush.bf16.msra.mxu0 %v2706
    %2817 = vmatpush.bf16.msra.mxu0 %v2705
    %2818 = vmatpush.bf16.msra.mxu0 %v2704
    %2819 = vmatpush.bf16.msra.mxu0 %v2703
    %2820 = vmatpush.bf16.msra.mxu0 %v2702
    %2821 = vmatmul.bf16.gmra.mxu0 %v2383
    %v2822 = vpop.f32.mrf.mxu0
    %v2823 = vadd.f32 %v2810, %v2822
    %v2824 = vpop.f32.mrf.mxu0
    %2825 = vdwg.mxu0
    %2826 = vmatpush.bf16.msra.mxu0 %v2717
    %2827 = vmatpush.bf16.msra.mxu0 %v2716
    %2828 = vmatpush.bf16.msra.mxu0 %v2715
    %2829 = vmatpush.bf16.msra.mxu0 %v2714
    %2830 = vmatpush.bf16.msra.mxu0 %v2713
    %2831 = vmatpush.bf16.msra.mxu0 %v2712
    %2832 = vmatpush.bf16.msra.mxu0 %v2711
    %2833 = vmatpush.bf16.msra.mxu0 %v2710
    %2834 = vmatmul.bf16.gmra.mxu0 %v2384
    %v2835 = vpop.f32.mrf.mxu0
    %v2836 = vadd.f32 %v2823, %v2835
    %v2837 = vpop.f32.mrf.mxu0
    %2838 = vdwg.mxu0
    %2839 = vmatpush.bf16.msra.mxu0 %v2725
    %2840 = vmatpush.bf16.msra.mxu0 %v2724
    %2841 = vmatpush.bf16.msra.mxu0 %v2723
    %2842 = vmatpush.bf16.msra.mxu0 %v2722
    %2843 = vmatpush.bf16.msra.mxu0 %v2721
    %2844 = vmatpush.bf16.msra.mxu0 %v2720
    %2845 = vmatpush.bf16.msra.mxu0 %v2719
    %2846 = vmatpush.bf16.msra.mxu0 %v2718
    %2847 = vmatmul.bf16.gmra.mxu0 %v2385
    %v2848 = vpop.f32.mrf.mxu0
    %v2849 = vadd.f32 %v2836, %v2848
    %v2850 = vpop.f32.mrf.mxu0
    %2851 = vdwg.mxu0
    %2852 = vst [vmem:[%s7] sm:$0xff] %v2849
    // Predicated region
    $region38: #{classifier_forward.1} parent=1 // pred_check
      _
    $region39: #{classifier_forward.1} parent=1 // pred_check_branch
      %2854 = sbr.rel (0) target = $region41
    $region40: #{classifier_forward.1} parent=1 // pred_region
      _
    $region41: #{classifier_forward.1} parent=1 // pred_fallthru
      _
    // Predicated region
    $region42: #{classifier_forward.1} parent=1 // pred_check
      _
    $region43: #{classifier_forward.1} parent=1 // pred_check_branch
      %2856 = sbr.rel (0) target = $region45
    $region44: #{classifier_forward.1} parent=1 // pred_region
      _
    $region45: #{classifier_forward.1} parent=1 // pred_fallthru
      _
    %2857 = vsyncpa [#allocation3], 1
    %2858 = vsyncpa [#allocation5], 1

</llo_original>
